<compile_context>
chip_gen: v6e
topology: v6e:2x2x1
jax: 0.10.0
libtpu: 0.0.40
codegen_flags: <defaults>
</compile_context>

<pallas_src>
import functools

import jax
import jax.numpy as jnp
from jax.experimental import pallas as pl
from jax.experimental.pallas import tpu as pltpu


def _round_up(x, m):
    return ((x + m - 1) // m) * m


def _painn_mixing_kernel(q_ref, mu_ref,
                         wV_ref, wW_ref,
                         w1q_ref, w1n_ref, b1_ref,
                         w2dq_ref, w2dmu_ref, w2dqmu_ref,
                         b2dq_ref, b2dmu_ref, b2dqmu_ref,
                         out_ref, *, epsilon, dot_dtype):
    # q_ref  : [TN, F]      (f32 input dtype)
    # mu_ref : [3, TN, F]   (f32 input dtype, spatial axis leading -> dense tiles)
    q = q_ref[...]
    mu0 = mu_ref[0]
    mu1 = mu_ref[1]
    mu2 = mu_ref[2]

    # MXU operands in dot_dtype (bf16 by default), accumulate in f32.
    qd = q.astype(dot_dtype)
    mu0d = mu0.astype(dot_dtype)
    mu1d = mu1.astype(dot_dtype)
    mu2d = mu2.astype(dot_dtype)
    wV = wV_ref[...]
    wW = wW_ref[...]

    # --- mu_channel_mix: Linear(F -> 2F, no bias), per spatial component -----
    muV0 = jnp.dot(mu0d, wV, preferred_element_type=jnp.float32)
    muV1 = jnp.dot(mu1d, wV, preferred_element_type=jnp.float32)
    muV2 = jnp.dot(mu2d, wV, preferred_element_type=jnp.float32)
    muW0 = jnp.dot(mu0d, wW, preferred_element_type=jnp.float32)
    muW1 = jnp.dot(mu1d, wW, preferred_element_type=jnp.float32)
    muW2 = jnp.dot(mu2d, wW, preferred_element_type=jnp.float32)

    # ||mu_V|| over the spatial axis (keepdim squeezed): [TN, F], f32
    mu_Vn = jnp.sqrt(muV0 * muV0 + muV1 * muV1 + muV2 * muV2 + epsilon)

    # --- intraatomic_context_net ---------------------------------------------
    # Dense(2F -> F, SiLU); the concat([q, mu_Vn]) is realized by splitting w1.
    h = (jnp.dot(qd, w1q_ref[...], preferred_element_type=jnp.float32)
         + jnp.dot(mu_Vn.astype(dot_dtype), w1n_ref[...],
                   preferred_element_type=jnp.float32)
         + b1_ref[...])
    h = h * jax.nn.sigmoid(h)                       # SiLU, f32 elementwise

    # Dense(F -> 3F, no activation); w2/b2 pre-split -> lane-aligned results.
    hd = h.astype(dot_dtype)
    dq = jnp.dot(hd, w2dq_ref[...], preferred_element_type=jnp.float32) + b2dq_ref[...]
    dmu = jnp.dot(hd, w2dmu_ref[...], preferred_element_type=jnp.float32) + b2dmu_ref[...]
    dqmu = jnp.dot(hd, w2dqmu_ref[...], preferred_element_type=jnp.float32) + b2dqmu_ref[...]

    # sum over spatial axis of mu_V * mu_W  -> [TN, F]
    vw = muV0 * muW0 + muV1 * muW1 + muV2 * muW2

    q_new = q + dq + dqmu * vw
    mu0_new = mu0 + dmu * muW0
    mu1_new = mu1 + dmu * muW1
    mu2_new = mu2 + dmu * muW2

    # Fused lane-dense output slab: [TN, 4F]  (q | mu_x | mu_y | mu_z)
    out_ref[...] = jnp.concatenate(
        [q_new, mu0_new, mu1_new, mu2_new], axis=-1).astype(out_ref.dtype)


def painn_mixing(q, mu, params, *, epsilon=1e-8, tile_n=512,
                 dot_dtype=jnp.bfloat16):
    """q: [N, 1, F], mu: [N, 3, F] -> (q_new [N, 1, F], mu_new [N, 3, F])."""
    N, one, F = q.shape
    assert one == 1 and mu.shape == (N, 3, F)

    # ---- weight prep (once per call, wrapper-side; same total DMA bytes) ----
    wmix = params["wmix"].astype(dot_dtype)             # [F, 2F]
    wV, wW = wmix[:, :F], wmix[:, F:]
    w1 = params["w1"].astype(dot_dtype)                 # [2F, F]
    w1q, w1n = w1[:F, :], w1[F:, :]
    w2 = params["w2"].astype(dot_dtype)                 # [F, 3F]
    w2dq, w2dmu, w2dqmu = w2[:, :F], w2[:, F:2 * F], w2[:, 2 * F:]
    b1 = params["b1"].astype(jnp.float32).reshape(1, F)
    b2 = params["b2"].astype(jnp.float32)
    b2dq = b2[:F].reshape(1, F)
    b2dmu = b2[F:2 * F].reshape(1, F)
    b2dqmu = b2[2 * F:].reshape(1, F)

    # ---- activation layout: q -> [N, F], mu -> [3, N, F] --------------------
    q2 = q.reshape(N, F)
    mu_t = jnp.transpose(mu, (1, 0, 2))                 # [3, N, F]

    # ---- tiling: large tiles, pad N, keep >= 2 grid steps when possible -----
    tile_n = max(8, min(tile_n, _round_up(N, 8)))
    if _round_up(N, tile_n) // tile_n < 2 and N > 8:
        tile_n = max(8, _round_up((N + 1) // 2, 8))     # feed both v7x cores
    N_pad = _round_up(N, tile_n)
    if N_pad != N:
        q2 = jnp.pad(q2, ((0, N_pad - N), (0, 0)))
        mu_t = jnp.pad(mu_t, ((0, 0), (0, N_pad - N), (0, 0)))

    grid = (N_pad // tile_n,)
    full2 = lambda i: (0, 0)                            # resident weight blocks

    kernel = functools.partial(_painn_mixing_kernel,
                               epsilon=epsilon, dot_dtype=dot_dtype)

    out = pl.pallas_call(
        kernel,
        out_shape=jax.ShapeDtypeStruct((N_pad, 4 * F), q.dtype),
        grid_spec=pltpu.PrefetchScalarGridSpec(
            num_scalar_prefetch=0,
            grid=grid,
            in_specs=[
                pl.BlockSpec((tile_n, F), lambda i: (i, 0)),        # q
                pl.BlockSpec((3, tile_n, F), lambda i: (0, i, 0)),  # mu [3,N,F]
                pl.BlockSpec((F, F), full2),                        # wV
                pl.BlockSpec((F, F), full2),                        # wW
                pl.BlockSpec((F, F), full2),                        # w1_q
                pl.BlockSpec((F, F), full2),                        # w1_n
                pl.BlockSpec((1, F), full2),                        # b1
                pl.BlockSpec((F, F), full2),                        # w2_dq
                pl.BlockSpec((F, F), full2),                        # w2_dmu
                pl.BlockSpec((F, F), full2),                        # w2_dqmu
                pl.BlockSpec((1, F), full2),                        # b2_dq
                pl.BlockSpec((1, F), full2),                        # b2_dmu
                pl.BlockSpec((1, F), full2),                        # b2_dqmu
            ],
            out_specs=pl.BlockSpec((tile_n, 4 * F), lambda i: (i, 0)),
        ),
        compiler_params=pltpu.CompilerParams(
            dimension_semantics=("parallel",)),
        # NOTE: at production sizes (F >= 256, tile_n >= 512) re-derive tile_n
        # per generation (v7x scoped VMEM default is 32 MiB) or raise
        # vmem_limit_bytes here.
    )(q2, mu_t, wV, wW, w1q, w1n, b1, w2dq, w2dmu, w2dqmu, b2dq, b2dmu, b2dqmu)

    out = out[:N]
    q_out = out[:, :F].reshape(N, 1, F)
    mu_out = jnp.stack(
        [out[:, F:2 * F], out[:, 2 * F:3 * F], out[:, 3 * F:]], axis=1)
    return q_out, mu_out


def painn_mixing_ref(q, mu, params, *, epsilon=1e-8, dot_dtype=jnp.float32):
    """Pure-JAX reference mirroring the PyTorch forward; dots use dot_dtype
    operands with f32 accumulation (so it can match the bf16 kernel path)."""
    F = q.shape[-1]
    f32 = jnp.float32
    c = lambda x: x.astype(dot_dtype)
    mu_mix = jnp.einsum("nvf,fg->nvg", c(mu), c(params["wmix"]),
                        preferred_element_type=f32)
    mu_V, mu_W = mu_mix[..., :F], mu_mix[..., F:]
    mu_Vn = jnp.sqrt(jnp.sum(mu_V ** 2, axis=-2, keepdims=True) + epsilon)
    ctx = jnp.concatenate([q.astype(f32), mu_Vn], axis=-1)
    h = jnp.einsum("nvf,fg->nvg", c(ctx), c(params["w1"]),
                   preferred_element_type=f32) + params["b1"].astype(f32)
    h = jax.nn.silu(h)
    x = jnp.einsum("nvf,fg->nvg", c(h), c(params["w2"]),
                   preferred_element_type=f32) + params["b2"].astype(f32)
    dq, dmu, dqmu = x[..., :F], x[..., F:2 * F], x[..., 2 * F:]
    dmu = dmu * mu_W
    dqmu = dqmu * jnp.sum(mu_V * mu_W, axis=1, keepdims=True)
    return q.astype(f32) + dq + dqmu, mu.astype(f32) + dmu


if __name__ == "__main__":
    N = 64            # atoms (small demo size; padded/tiled internally)
    F = 32            # n_atom_basis
    dtype = jnp.float32

    key = jax.random.PRNGKey(0)
    k_q, k_mu, k0, k1, k2 = jax.random.split(key, 5)

    q = jax.random.normal(k_q, (N, 1, F), dtype)
    mu = jax.random.normal(k_mu, (N, 3, F), dtype)

    # Deterministic synthetic parameters (stored [in, out]; y = x @ W + b)
    params = {
        "wmix": jax.random.normal(k0, (F, 2 * F), dtype) / jnp.sqrt(F),
        "w1":   jax.random.normal(k1, (2 * F, F), dtype) / jnp.sqrt(2 * F),
        "b1":   jnp.zeros((F,), dtype),
        "w2":   jax.random.normal(k2, (F, 3 * F), dtype) / jnp.sqrt(F),
        "b2":   jnp.zeros((3 * F,), dtype),
    }

    # f32-dot path: bit-close to the exact PyTorch math.
    q_f32, mu_f32 = painn_mixing(q, mu, params, dot_dtype=jnp.float32)
    jax.block_until_ready((q_f32, mu_f32))
    q_ref32, mu_ref32 = painn_mixing_ref(q, mu, params, dot_dtype=jnp.float32)
    assert jnp.allclose(q_f32, q_ref32, atol=1e-5, rtol=1e-5)
    assert jnp.allclose(mu_f32, mu_ref32, atol=1e-5, rtol=1e-5)

    # bf16-dot fast path (default): compare against a reference with the same
    # operand casts (f32 accumulation) — only accumulation-order noise remains.
    q_out, mu_out = painn_mixing(q, mu, params)
    jax.block_until_ready((q_out, mu_out))
    q_refb, mu_refb = painn_mixing_ref(q, mu, params, dot_dtype=jnp.bfloat16)
    assert jnp.allclose(q_out, q_refb, atol=1e-3, rtol=1e-3)
    assert jnp.allclose(mu_out, mu_refb, atol=1e-3, rtol=1e-3)

    print("KERNEL_OK")
</pallas_src>

<mosaic_0001>
module attributes {stable_mosaic.version = 11 : i64} {
  func.func @_painn_mixing_kernel(%arg0: i32, %arg1: memref<32x32xf32, #tpu.memory_space<vmem>>, %arg2: memref<3x32x32xf32, #tpu.memory_space<vmem>>, %arg3: memref<32x32xf32, #tpu.memory_space<vmem>>, %arg4: memref<32x32xf32, #tpu.memory_space<vmem>>, %arg5: memref<32x32xf32, #tpu.memory_space<vmem>>, %arg6: memref<32x32xf32, #tpu.memory_space<vmem>>, %arg7: memref<1x32xf32, #tpu.memory_space<vmem>>, %arg8: memref<32x32xf32, #tpu.memory_space<vmem>>, %arg9: memref<32x32xf32, #tpu.memory_space<vmem>>, %arg10: memref<32x32xf32, #tpu.memory_space<vmem>>, %arg11: memref<1x32xf32, #tpu.memory_space<vmem>>, %arg12: memref<1x32xf32, #tpu.memory_space<vmem>>, %arg13: memref<1x32xf32, #tpu.memory_space<vmem>>, %arg14: memref<32x128xf32, #tpu.memory_space<vmem>>) attributes {dimension_semantics = [#tpu.dimension_semantics<parallel>], iteration_bounds = array<i64: 2>, scalar_prefetch = 0 : i64, scratch_operands = 0 : i64, tpu.core_type = #tpu.core_type<tc>, window_params = [{transform_indices = @transform_0, window_bounds = array<i64: 32, 32>}, {transform_indices = @transform_1, window_bounds = array<i64: 3, 32, 32>}, {pipeline_mode = #tpu.pipeline_mode<synchronous>, transform_indices = @transform_2, window_bounds = array<i64: 32, 32>}, {pipeline_mode = #tpu.pipeline_mode<synchronous>, transform_indices = @transform_3, window_bounds = array<i64: 32, 32>}, {pipeline_mode = #tpu.pipeline_mode<synchronous>, transform_indices = @transform_4, window_bounds = array<i64: 32, 32>}, {pipeline_mode = #tpu.pipeline_mode<synchronous>, transform_indices = @transform_5, window_bounds = array<i64: 32, 32>}, {pipeline_mode = #tpu.pipeline_mode<synchronous>, transform_indices = @transform_6, window_bounds = array<i64: 1, 32>}, {pipeline_mode = #tpu.pipeline_mode<synchronous>, transform_indices = @transform_7, window_bounds = array<i64: 32, 32>}, {pipeline_mode = #tpu.pipeline_mode<synchronous>, transform_indices = @transform_8, window_bounds = array<i64: 32, 32>}, {pipeline_mode = #tpu.pipeline_mode<synchronous>, transform_indices = @transform_9, window_bounds = array<i64: 32, 32>}, {pipeline_mode = #tpu.pipeline_mode<synchronous>, transform_indices = @transform_10, window_bounds = array<i64: 1, 32>}, {pipeline_mode = #tpu.pipeline_mode<synchronous>, transform_indices = @transform_11, window_bounds = array<i64: 1, 32>}, {pipeline_mode = #tpu.pipeline_mode<synchronous>, transform_indices = @transform_12, window_bounds = array<i64: 1, 32>}, {transform_indices = @transform_13, window_bounds = array<i64: 32, 128>}]} {
    %c0 = arith.constant 0 : index
    %c0_0 = arith.constant 0 : index
    %0 = vector.load %arg1[%c0, %c0_0] : memref<32x32xf32, #tpu.memory_space<vmem>>, vector<32x32xf32>
    %c0_1 = arith.constant 0 : index
    %c0_2 = arith.constant 0 : index
    %c0_3 = arith.constant 0 : index
    %1 = vector.load %arg2[%c0_1, %c0_2, %c0_3] : memref<3x32x32xf32, #tpu.memory_space<vmem>>, vector<1x32x32xf32>
    %2 = vector.shape_cast %1 : vector<1x32x32xf32> to vector<32x32xf32>
    %c1 = arith.constant 1 : index
    %c0_4 = arith.constant 0 : index
    %c0_5 = arith.constant 0 : index
    %3 = vector.load %arg2[%c1, %c0_4, %c0_5] : memref<3x32x32xf32, #tpu.memory_space<vmem>>, vector<1x32x32xf32>
    %4 = vector.shape_cast %3 : vector<1x32x32xf32> to vector<32x32xf32>
    %c2 = arith.constant 2 : index
    %c0_6 = arith.constant 0 : index
    %c0_7 = arith.constant 0 : index
    %5 = vector.load %arg2[%c2, %c0_6, %c0_7] : memref<3x32x32xf32, #tpu.memory_space<vmem>>, vector<1x32x32xf32>
    %6 = vector.shape_cast %5 : vector<1x32x32xf32> to vector<32x32xf32>
    %c0_8 = arith.constant 0 : index
    %c0_9 = arith.constant 0 : index
    %7 = vector.load %arg3[%c0_8, %c0_9] : memref<32x32xf32, #tpu.memory_space<vmem>>, vector<32x32xf32>
    %c0_10 = arith.constant 0 : index
    %c0_11 = arith.constant 0 : index
    %8 = vector.load %arg4[%c0_10, %c0_11] : memref<32x32xf32, #tpu.memory_space<vmem>>, vector<32x32xf32>
    %cst = arith.constant dense<0.000000e+00> : vector<32x32xf32>
    %9 = tpu.matmul %2, %7, %cst {dimension_numbers = #tpu.dot_dimension_numbers<[1], [0], [0], [1], [0, 0, 1, 1], [], []>} : vector<32x32xf32>, vector<32x32xf32>, vector<32x32xf32> -> vector<32x32xf32>
    %cst_12 = arith.constant dense<0.000000e+00> : vector<32x32xf32>
    %10 = tpu.matmul %4, %7, %cst_12 {dimension_numbers = #tpu.dot_dimension_numbers<[1], [0], [0], [1], [0, 0, 1, 1], [], []>} : vector<32x32xf32>, vector<32x32xf32>, vector<32x32xf32> -> vector<32x32xf32>
    %cst_13 = arith.constant dense<0.000000e+00> : vector<32x32xf32>
    %11 = tpu.matmul %6, %7, %cst_13 {dimension_numbers = #tpu.dot_dimension_numbers<[1], [0], [0], [1], [0, 0, 1, 1], [], []>} : vector<32x32xf32>, vector<32x32xf32>, vector<32x32xf32> -> vector<32x32xf32>
    %cst_14 = arith.constant dense<0.000000e+00> : vector<32x32xf32>
    %12 = tpu.matmul %2, %8, %cst_14 {dimension_numbers = #tpu.dot_dimension_numbers<[1], [0], [0], [1], [0, 0, 1, 1], [], []>} : vector<32x32xf32>, vector<32x32xf32>, vector<32x32xf32> -> vector<32x32xf32>
    %cst_15 = arith.constant dense<0.000000e+00> : vector<32x32xf32>
    %13 = tpu.matmul %4, %8, %cst_15 {dimension_numbers = #tpu.dot_dimension_numbers<[1], [0], [0], [1], [0, 0, 1, 1], [], []>} : vector<32x32xf32>, vector<32x32xf32>, vector<32x32xf32> -> vector<32x32xf32>
    %cst_16 = arith.constant dense<0.000000e+00> : vector<32x32xf32>
    %14 = tpu.matmul %6, %8, %cst_16 {dimension_numbers = #tpu.dot_dimension_numbers<[1], [0], [0], [1], [0, 0, 1, 1], [], []>} : vector<32x32xf32>, vector<32x32xf32>, vector<32x32xf32> -> vector<32x32xf32>
    %15 = arith.mulf %9, %9 : vector<32x32xf32>
    %16 = arith.mulf %10, %10 : vector<32x32xf32>
    %17 = arith.addf %15, %16 : vector<32x32xf32>
    %18 = arith.mulf %11, %11 : vector<32x32xf32>
    %19 = arith.addf %17, %18 : vector<32x32xf32>
    %cst_17 = arith.constant 9.99999993E-9 : f32
    %20 = vector.broadcast %cst_17 : f32 to vector<32x32xf32>
    %21 = arith.addf %19, %20 : vector<32x32xf32>
    %22 = math.sqrt %21 : vector<32x32xf32>
    %c0_18 = arith.constant 0 : index
    %c0_19 = arith.constant 0 : index
    %23 = vector.load %arg5[%c0_18, %c0_19] : memref<32x32xf32, #tpu.memory_space<vmem>>, vector<32x32xf32>
    %cst_20 = arith.constant dense<0.000000e+00> : vector<32x32xf32>
    %24 = tpu.matmul %0, %23, %cst_20 {dimension_numbers = #tpu.dot_dimension_numbers<[1], [0], [0], [1], [0, 0, 1, 1], [], []>} : vector<32x32xf32>, vector<32x32xf32>, vector<32x32xf32> -> vector<32x32xf32>
    %c0_21 = arith.constant 0 : index
    %c0_22 = arith.constant 0 : index
    %25 = vector.load %arg6[%c0_21, %c0_22] : memref<32x32xf32, #tpu.memory_space<vmem>>, vector<32x32xf32>
    %cst_23 = arith.constant dense<0.000000e+00> : vector<32x32xf32>
    %26 = tpu.matmul %22, %25, %cst_23 {dimension_numbers = #tpu.dot_dimension_numbers<[1], [0], [0], [1], [0, 0, 1, 1], [], []>} : vector<32x32xf32>, vector<32x32xf32>, vector<32x32xf32> -> vector<32x32xf32>
    %27 = arith.addf %24, %26 : vector<32x32xf32>
    %c0_24 = arith.constant 0 : index
    %c0_25 = arith.constant 0 : index
    %28 = vector.load %arg7[%c0_24, %c0_25] : memref<1x32xf32, #tpu.memory_space<vmem>>, vector<1x32xf32>
    %29 = vector.broadcast %28 : vector<1x32xf32> to vector<32x32xf32>
    %30 = arith.addf %27, %29 : vector<32x32xf32>
    %31 = arith.negf %30 : vector<32x32xf32>
    %32 = math.exp %31 : vector<32x32xf32>
    %cst_26 = arith.constant 1.000000e+00 : f32
    %33 = vector.broadcast %cst_26 : f32 to vector<32x32xf32>
    %34 = arith.addf %33, %32 : vector<32x32xf32>
    %35 = arith.divf %33, %34 : vector<32x32xf32>
    %36 = arith.mulf %30, %35 : vector<32x32xf32>
    %c0_27 = arith.constant 0 : index
    %c0_28 = arith.constant 0 : index
    %37 = vector.load %arg8[%c0_27, %c0_28] : memref<32x32xf32, #tpu.memory_space<vmem>>, vector<32x32xf32>
    %cst_29 = arith.constant dense<0.000000e+00> : vector<32x32xf32>
    %38 = tpu.matmul %36, %37, %cst_29 {dimension_numbers = #tpu.dot_dimension_numbers<[1], [0], [0], [1], [0, 0, 1, 1], [], []>} : vector<32x32xf32>, vector<32x32xf32>, vector<32x32xf32> -> vector<32x32xf32>
    %c0_30 = arith.constant 0 : index
    %c0_31 = arith.constant 0 : index
    %39 = vector.load %arg11[%c0_30, %c0_31] : memref<1x32xf32, #tpu.memory_space<vmem>>, vector<1x32xf32>
    %40 = vector.broadcast %39 : vector<1x32xf32> to vector<32x32xf32>
    %41 = arith.addf %38, %40 : vector<32x32xf32>
    %c0_32 = arith.constant 0 : index
    %c0_33 = arith.constant 0 : index
    %42 = vector.load %arg9[%c0_32, %c0_33] : memref<32x32xf32, #tpu.memory_space<vmem>>, vector<32x32xf32>
    %cst_34 = arith.constant dense<0.000000e+00> : vector<32x32xf32>
    %43 = tpu.matmul %36, %42, %cst_34 {dimension_numbers = #tpu.dot_dimension_numbers<[1], [0], [0], [1], [0, 0, 1, 1], [], []>} : vector<32x32xf32>, vector<32x32xf32>, vector<32x32xf32> -> vector<32x32xf32>
    %c0_35 = arith.constant 0 : index
    %c0_36 = arith.constant 0 : index
    %44 = vector.load %arg12[%c0_35, %c0_36] : memref<1x32xf32, #tpu.memory_space<vmem>>, vector<1x32xf32>
    %45 = vector.broadcast %44 : vector<1x32xf32> to vector<32x32xf32>
    %46 = arith.addf %43, %45 : vector<32x32xf32>
    %c0_37 = arith.constant 0 : index
    %c0_38 = arith.constant 0 : index
    %47 = vector.load %arg10[%c0_37, %c0_38] : memref<32x32xf32, #tpu.memory_space<vmem>>, vector<32x32xf32>
    %cst_39 = arith.constant dense<0.000000e+00> : vector<32x32xf32>
    %48 = tpu.matmul %36, %47, %cst_39 {dimension_numbers = #tpu.dot_dimension_numbers<[1], [0], [0], [1], [0, 0, 1, 1], [], []>} : vector<32x32xf32>, vector<32x32xf32>, vector<32x32xf32> -> vector<32x32xf32>
    %c0_40 = arith.constant 0 : index
    %c0_41 = arith.constant 0 : index
    %49 = vector.load %arg13[%c0_40, %c0_41] : memref<1x32xf32, #tpu.memory_space<vmem>>, vector<1x32xf32>
    %50 = vector.broadcast %49 : vector<1x32xf32> to vector<32x32xf32>
    %51 = arith.addf %48, %50 : vector<32x32xf32>
    %52 = arith.mulf %9, %12 : vector<32x32xf32>
    %53 = arith.mulf %10, %13 : vector<32x32xf32>
    %54 = arith.addf %52, %53 : vector<32x32xf32>
    %55 = arith.mulf %11, %14 : vector<32x32xf32>
    %56 = arith.addf %54, %55 : vector<32x32xf32>
    %57 = arith.addf %0, %41 : vector<32x32xf32>
    %58 = arith.mulf %51, %56 : vector<32x32xf32>
    %59 = arith.addf %57, %58 : vector<32x32xf32>
    %60 = arith.mulf %46, %12 : vector<32x32xf32>
    %61 = arith.addf %2, %60 : vector<32x32xf32>
    %62 = arith.mulf %46, %13 : vector<32x32xf32>
    %63 = arith.addf %4, %62 : vector<32x32xf32>
    %64 = arith.mulf %46, %14 : vector<32x32xf32>
    %65 = arith.addf %6, %64 : vector<32x32xf32>
    %66 = tpu.concatenate %59, %61, %63, %65 in 1 : vector<32x32xf32>, vector<32x32xf32>, vector<32x32xf32>, vector<32x32xf32> -> vector<32x128xf32>
    %c0_42 = arith.constant 0 : index
    %c0_43 = arith.constant 0 : index
    %67 = vector.load %arg14[%c0_42, %c0_43] : memref<32x128xf32, #tpu.memory_space<vmem>>, vector<32x128xf32>
    tpu.vector_store %arg14[%c0_42, %c0_43], %66 {strides = array<i32>} : memref<32x128xf32, #tpu.memory_space<vmem>>, vector<32x128xf32>,
    return
  }
  func.func @transform_0(%arg0: i32) -> (i32, i32) {
    %c0_i32 = arith.constant 0 : i32
    %c0_i32_0 = arith.constant 0 : i32
    return %arg0, %c0_i32 : i32, i32
  }
  func.func @transform_1(%arg0: i32) -> (i32, i32, i32) {
    %c0_i32 = arith.constant 0 : i32
    %c0_i32_0 = arith.constant 0 : i32
    %c0_i32_1 = arith.constant 0 : i32
    return %c0_i32, %arg0, %c0_i32_0 : i32, i32, i32
  }
  func.func @transform_2(%arg0: i32) -> (i32, i32) {
    %c0_i32 = arith.constant 0 : i32
    %c0_i32_0 = arith.constant 0 : i32
    %c0_i32_1 = arith.constant 0 : i32
    return %c0_i32, %c0_i32_0 : i32, i32
  }
  func.func @transform_3(%arg0: i32) -> (i32, i32) {
    %c0_i32 = arith.constant 0 : i32
    %c0_i32_0 = arith.constant 0 : i32
    %c0_i32_1 = arith.constant 0 : i32
    return %c0_i32, %c0_i32_0 : i32, i32
  }
  func.func @transform_4(%arg0: i32) -> (i32, i32) {
    %c0_i32 = arith.constant 0 : i32
    %c0_i32_0 = arith.constant 0 : i32
    %c0_i32_1 = arith.constant 0 : i32
    return %c0_i32, %c0_i32_0 : i32, i32
  }
  func.func @transform_5(%arg0: i32) -> (i32, i32) {
    %c0_i32 = arith.constant 0 : i32
    %c0_i32_0 = arith.constant 0 : i32
    %c0_i32_1 = arith.constant 0 : i32
    return %c0_i32, %c0_i32_0 : i32, i32
  }
  func.func @transform_6(%arg0: i32) -> (i32, i32) {
    %c0_i32 = arith.constant 0 : i32
    %c0_i32_0 = arith.constant 0 : i32
    %c0_i32_1 = arith.constant 0 : i32
    return %c0_i32, %c0_i32_0 : i32, i32
  }
  func.func @transform_7(%arg0: i32) -> (i32, i32) {
    %c0_i32 = arith.constant 0 : i32
    %c0_i32_0 = arith.constant 0 : i32
    %c0_i32_1 = arith.constant 0 : i32
    return %c0_i32, %c0_i32_0 : i32, i32
  }
  func.func @transform_8(%arg0: i32) -> (i32, i32) {
    %c0_i32 = arith.constant 0 : i32
    %c0_i32_0 = arith.constant 0 : i32
    %c0_i32_1 = arith.constant 0 : i32
    return %c0_i32, %c0_i32_0 : i32, i32
  }
  func.func @transform_9(%arg0: i32) -> (i32, i32) {
    %c0_i32 = arith.constant 0 : i32
    %c0_i32_0 = arith.constant 0 : i32
    %c0_i32_1 = arith.constant 0 : i32
    return %c0_i32, %c0_i32_0 : i32, i32
  }
  func.func @transform_10(%arg0: i32) -> (i32, i32) {
    %c0_i32 = arith.constant 0 : i32
    %c0_i32_0 = arith.constant 0 : i32
    %c0_i32_1 = arith.constant 0 : i32
    return %c0_i32, %c0_i32_0 : i32, i32
  }
  func.func @transform_11(%arg0: i32) -> (i32, i32) {
    %c0_i32 = arith.constant 0 : i32
    %c0_i32_0 = arith.constant 0 : i32
    %c0_i32_1 = arith.constant 0 : i32
    return %c0_i32, %c0_i32_0 : i32, i32
  }
  func.func @transform_12(%arg0: i32) -> (i32, i32) {
    %c0_i32 = arith.constant 0 : i32
    %c0_i32_0 = arith.constant 0 : i32
    %c0_i32_1 = arith.constant 0 : i32
    return %c0_i32, %c0_i32_0 : i32, i32
  }
  func.func @transform_13(%arg0: i32) -> (i32, i32) {
    %c0_i32 = arith.constant 0 : i32
    %c0_i32_0 = arith.constant 0 : i32
    return %arg0, %c0_i32 : i32, i32
  }
}

</mosaic_0001>

<llo_original>
// kernel: tpu_custom_call.1
$region0: #{tpu_custom_call.1}
  #allocation0 [shape = 'u32[]', space=smem, size = 0x4, offset = 0x4, fixed_abs, tag = 'smem constant byte address 0x4 - core index']
  #allocation1 [shape = 'u32[144,128]{1,0:T(1,128)}', space=vmem, size = 0x12000, scoped, tag = 'internal scratch']
  %s0 = inlined_call_operand.vmem [shape: f32[64,32], index: 0, kind: input, shape index: {}]
  %s1 = inlined_call_operand.vmem [shape: f32[3,64,32], index: 1, kind: input, shape index: {}]
  %s2 = inlined_call_operand.vmem [shape: f32[32,32], index: 2, kind: input, shape index: {}]
  %s3 = inlined_call_operand.vmem [shape: f32[32,32], index: 3, kind: input, shape index: {}]
  %s4 = inlined_call_operand.vmem [shape: f32[32,32], index: 4, kind: input, shape index: {}]
  %s5 = inlined_call_operand.vmem [shape: f32[32,32], index: 5, kind: input, shape index: {}]
  %s6 = inlined_call_operand.vmem [shape: f32[1,32], index: 6, kind: input, shape index: {}]
  %s7 = inlined_call_operand.vmem [shape: f32[32,32], index: 7, kind: input, shape index: {}]
  %s8 = inlined_call_operand.vmem [shape: f32[32,32], index: 8, kind: input, shape index: {}]
  %s9 = inlined_call_operand.vmem [shape: f32[32,32], index: 9, kind: input, shape index: {}]
  %s10 = inlined_call_operand.vmem [shape: f32[1,32], index: 10, kind: input, shape index: {}]
  %s11 = inlined_call_operand.vmem [shape: f32[1,32], index: 11, kind: input, shape index: {}]
  %s12 = inlined_call_operand.vmem [shape: f32[1,32], index: 12, kind: input, shape index: {}]
  %s13 = inlined_call_operand.hbm [shape: f32[64,128], index: 13, kind: output, shape index: {}]
  %s14 = sld [smem:[#allocation0]]
  $region123: #{tpu_custom_call.1} parent=0
    _
  %s16 = ssub.s32 1, %s14
  %s17 = scalar_select 0, %s16, %s14
  $region1: #{tpu_custom_call.1} parent=0
    #allocation2 [shape = 'u8[98304]{0}', space=vmem, size = 0x18000, scoped, tag = 'input window, operand 1']
    #allocation3 [shape = 'u8[32768]{0}', space=vmem, size = 0x8000, scoped, tag = 'output window, operand 0']
    #allocation4 [shape = 's32[2]{0}', space=sflag, size = 0x8, scoped, tag = 'scoped memory for tpu_custom_call.1']
    %18 = vsyncpa [#allocation4], 0
    %s19 = scalar_lea.sflag [#allocation4], 1
    %20 = vsyncpa %s19, 0
    loop: start=0, step=1, limit=4
    $region2: #{tpu_custom_call.1} parent=1 // loop_pre_header
      _
    $region3: #{tpu_custom_call.1} parent=1 // loop_header
      %s22 = sphi 0, %s26
      %p23 = scmp.ge.s32.totalorder %s22, 4
      %s32 = sphi 0, %s34
      %s35 = sphi 0, %s32
      %s36 = sphi 0, %s35
      %s52 = sphi 0, %s36
      %s58 = sphi 0, %s60
      %s61 = sphi 0, %s58
      %s62 = sphi 0, %s61
      %s78 = sphi 0, %s62
      %s82 = sphi 0, %s82
      %s84 = sphi 0, %s82
      %s85 = sphi 0, %s84
      %s99 = sphi 0, %s85
      %s103 = sphi 0, %s103
      %s105 = sphi 0, %s103
      %s106 = sphi 0, %s105
      %s120 = sphi 0, %s106
      %s124 = sphi 0, %s124
      %s126 = sphi 0, %s124
      %s127 = sphi 0, %s126
      %s141 = sphi 0, %s127
      %s145 = sphi 0, %s145
      %s147 = sphi 0, %s145
      %s148 = sphi 0, %s147
      %s162 = sphi 0, %s148
      %s166 = sphi 0, %s166
      %s168 = sphi 0, %s166
      %s169 = sphi 0, %s168
      %s183 = sphi 0, %s169
      %s187 = sphi 0, %s187
      %s189 = sphi 0, %s187
      %s190 = sphi 0, %s189
      %s204 = sphi 0, %s190
      %s208 = sphi 0, %s208
      %s210 = sphi 0, %s208
      %s211 = sphi 0, %s210
      %s225 = sphi 0, %s211
      %s229 = sphi 0, %s229
      %s231 = sphi 0, %s229
      %s232 = sphi 0, %s231
      %s246 = sphi 0, %s232
      %s250 = sphi 0, %s250
      %s252 = sphi 0, %s250
      %s253 = sphi 0, %s252
      %s267 = sphi 0, %s253
      %s271 = sphi 0, %s271
      %s273 = sphi 0, %s271
      %s274 = sphi 0, %s273
      %s288 = sphi 0, %s274
      %s292 = sphi 0, %s292
      %s294 = sphi 0, %s292
      %s295 = sphi 0, %s294
      %s309 = sphi 0, %s295
      %s315 = sphi 0, %s317
      %s318 = sphi 0, %s315
      %s319 = sphi 0, %s318
      %s335 = sphi 0, %s319
    $region4: #{tpu_custom_call.1} parent=1 // loop_header_branch
      %25 = sbr.rel (%p23) target = $region8
    $region5: #{tpu_custom_call.1} parent=1 // loop_body
      %s27 = ssub.s32 %s22, 1
      %s28 = ssub.s32 %s22, 2
      %s29 = sadd.s32 %s22, 1
      %s30 = ssub.s32 %s22, %s29
      %p31 = scmp.eq.s32.totalorder %s30, 0
      %s33 = sadd.s32 %s32, 1
      %s34 = scalar_select %p31, %s32, %s33
      %p37 = pneg %p31
      %p38 = scmp.eq.s32.totalorder %s22, 1
      %p39 = por %p37, %p38
      %p40 = scmp.ne.s32.totalorder %s32, %s35
      %p41 = scmp.eq.s32.totalorder %s22, 0
      %p42 = por %p40, %p41
      %p43 = scmp.ne.s32.totalorder %s32, %s35
      %p44 = scmp.eq.s32.totalorder %s27, 1
      %p45 = por %p43, %p44
      %p46 = scmp.ne.s32.totalorder %s35, %s36
      %p47 = scmp.eq.s32.totalorder %s27, 0
      %p48 = por %p46, %p47
      %p49 = scmp.ne.s32.totalorder %s35, %s36
      %p50 = scmp.eq.s32.totalorder %s28, 1
      %p51 = por %p49, %p50
      %p53 = scmp.ne.s32.totalorder %s36, %s52
      %p54 = scmp.eq.s32.totalorder %s28, 0
      %p55 = por %p53, %p54
      %s56 = ssub.s32 %s22, %s29
      %p57 = scmp.eq.s32.totalorder %s56, 0
      %s59 = sadd.s32 %s58, 1
      %s60 = scalar_select %p57, %s58, %s59
      %p63 = pneg %p57
      %p64 = scmp.eq.s32.totalorder %s22, 1
      %p65 = por %p63, %p64
      %p66 = scmp.ne.s32.totalorder %s58, %s61
      %p67 = scmp.eq.s32.totalorder %s22, 0
      %p68 = por %p66, %p67
      %p69 = scmp.ne.s32.totalorder %s58, %s61
      %p70 = scmp.eq.s32.totalorder %s27, 1
      %p71 = por %p69, %p70
      %p72 = scmp.ne.s32.totalorder %s61, %s62
      %p73 = scmp.eq.s32.totalorder %s27, 0
      %p74 = por %p72, %p73
      %p75 = scmp.ne.s32.totalorder %s61, %s62
      %p76 = scmp.eq.s32.totalorder %s28, 1
      %p77 = por %p75, %p76
      %p79 = scmp.ne.s32.totalorder %s62, %s78
      %p80 = scmp.eq.s32.totalorder %s28, 0
      %p81 = por %p79, %p80
      %s83 = sadd.s32 %s82, 1
      %p86 = scmp.eq.s32.totalorder %s22, 1
      %p87 = scmp.ne.s32.totalorder %s82, %s84
      %p88 = scmp.eq.s32.totalorder %s22, 0
      %p89 = por %p87, %p88
      %p90 = scmp.ne.s32.totalorder %s82, %s84
      %p91 = scmp.eq.s32.totalorder %s27, 1
      %p92 = por %p90, %p91
      %p93 = scmp.ne.s32.totalorder %s84, %s85
      %p94 = scmp.eq.s32.totalorder %s27, 0
      %p95 = por %p93, %p94
      %p96 = scmp.ne.s32.totalorder %s84, %s85
      %p97 = scmp.eq.s32.totalorder %s28, 1
      %p98 = por %p96, %p97
      %p100 = scmp.ne.s32.totalorder %s85, %s99
      %p101 = scmp.eq.s32.totalorder %s28, 0
      %p102 = por %p100, %p101
      %s104 = sadd.s32 %s103, 1
      %p107 = scmp.eq.s32.totalorder %s22, 1
      %p108 = scmp.ne.s32.totalorder %s103, %s105
      %p109 = scmp.eq.s32.totalorder %s22, 0
      %p110 = por %p108, %p109
      %p111 = scmp.ne.s32.totalorder %s103, %s105
      %p112 = scmp.eq.s32.totalorder %s27, 1
      %p113 = por %p111, %p112
      %p114 = scmp.ne.s32.totalorder %s105, %s106
      %p115 = scmp.eq.s32.totalorder %s27, 0
      %p116 = por %p114, %p115
      %p117 = scmp.ne.s32.totalorder %s105, %s106
      %p118 = scmp.eq.s32.totalorder %s28, 1
      %p119 = por %p117, %p118
      %p121 = scmp.ne.s32.totalorder %s106, %s120
      %p122 = scmp.eq.s32.totalorder %s28, 0
      %p123 = por %p121, %p122
      %s125 = sadd.s32 %s124, 1
      %p128 = scmp.eq.s32.totalorder %s22, 1
      %p129 = scmp.ne.s32.totalorder %s124, %s126
      %p130 = scmp.eq.s32.totalorder %s22, 0
      %p131 = por %p129, %p130
      %p132 = scmp.ne.s32.totalorder %s124, %s126
      %p133 = scmp.eq.s32.totalorder %s27, 1
      %p134 = por %p132, %p133
      %p135 = scmp.ne.s32.totalorder %s126, %s127
      %p136 = scmp.eq.s32.totalorder %s27, 0
      %p137 = por %p135, %p136
      %p138 = scmp.ne.s32.totalorder %s126, %s127
      %p139 = scmp.eq.s32.totalorder %s28, 1
      %p140 = por %p138, %p139
      %p142 = scmp.ne.s32.totalorder %s127, %s141
      %p143 = scmp.eq.s32.totalorder %s28, 0
      %p144 = por %p142, %p143
      %s146 = sadd.s32 %s145, 1
      %p149 = scmp.eq.s32.totalorder %s22, 1
      %p150 = scmp.ne.s32.totalorder %s145, %s147
      %p151 = scmp.eq.s32.totalorder %s22, 0
      %p152 = por %p150, %p151
      %p153 = scmp.ne.s32.totalorder %s145, %s147
      %p154 = scmp.eq.s32.totalorder %s27, 1
      %p155 = por %p153, %p154
      %p156 = scmp.ne.s32.totalorder %s147, %s148
      %p157 = scmp.eq.s32.totalorder %s27, 0
      %p158 = por %p156, %p157
      %p159 = scmp.ne.s32.totalorder %s147, %s148
      %p160 = scmp.eq.s32.totalorder %s28, 1
      %p161 = por %p159, %p160
      %p163 = scmp.ne.s32.totalorder %s148, %s162
      %p164 = scmp.eq.s32.totalorder %s28, 0
      %p165 = por %p163, %p164
      %s167 = sadd.s32 %s166, 1
      %p170 = scmp.eq.s32.totalorder %s22, 1
      %p171 = scmp.ne.s32.totalorder %s166, %s168
      %p172 = scmp.eq.s32.totalorder %s22, 0
      %p173 = por %p171, %p172
      %p174 = scmp.ne.s32.totalorder %s166, %s168
      %p175 = scmp.eq.s32.totalorder %s27, 1
      %p176 = por %p174, %p175
      %p177 = scmp.ne.s32.totalorder %s168, %s169
      %p178 = scmp.eq.s32.totalorder %s27, 0
      %p179 = por %p177, %p178
      %p180 = scmp.ne.s32.totalorder %s168, %s169
      %p181 = scmp.eq.s32.totalorder %s28, 1
      %p182 = por %p180, %p181
      %p184 = scmp.ne.s32.totalorder %s169, %s183
      %p185 = scmp.eq.s32.totalorder %s28, 0
      %p186 = por %p184, %p185
      %s188 = sadd.s32 %s187, 1
      %p191 = scmp.eq.s32.totalorder %s22, 1
      %p192 = scmp.ne.s32.totalorder %s187, %s189
      %p193 = scmp.eq.s32.totalorder %s22, 0
      %p194 = por %p192, %p193
      %p195 = scmp.ne.s32.totalorder %s187, %s189
      %p196 = scmp.eq.s32.totalorder %s27, 1
      %p197 = por %p195, %p196
      %p198 = scmp.ne.s32.totalorder %s189, %s190
      %p199 = scmp.eq.s32.totalorder %s27, 0
      %p200 = por %p198, %p199
      %p201 = scmp.ne.s32.totalorder %s189, %s190
      %p202 = scmp.eq.s32.totalorder %s28, 1
      %p203 = por %p201, %p202
      %p205 = scmp.ne.s32.totalorder %s190, %s204
      %p206 = scmp.eq.s32.totalorder %s28, 0
      %p207 = por %p205, %p206
      %s209 = sadd.s32 %s208, 1
      %p212 = scmp.eq.s32.totalorder %s22, 1
      %p213 = scmp.ne.s32.totalorder %s208, %s210
      %p214 = scmp.eq.s32.totalorder %s22, 0
      %p215 = por %p213, %p214
      %p216 = scmp.ne.s32.totalorder %s208, %s210
      %p217 = scmp.eq.s32.totalorder %s27, 1
      %p218 = por %p216, %p217
      %p219 = scmp.ne.s32.totalorder %s210, %s211
      %p220 = scmp.eq.s32.totalorder %s27, 0
      %p221 = por %p219, %p220
      %p222 = scmp.ne.s32.totalorder %s210, %s211
      %p223 = scmp.eq.s32.totalorder %s28, 1
      %p224 = por %p222, %p223
      %p226 = scmp.ne.s32.totalorder %s211, %s225
      %p227 = scmp.eq.s32.totalorder %s28, 0
      %p228 = por %p226, %p227
      %s230 = sadd.s32 %s229, 1
      %p233 = scmp.eq.s32.totalorder %s22, 1
      %p234 = scmp.ne.s32.totalorder %s229, %s231
      %p235 = scmp.eq.s32.totalorder %s22, 0
      %p236 = por %p234, %p235
      %p237 = scmp.ne.s32.totalorder %s229, %s231
      %p238 = scmp.eq.s32.totalorder %s27, 1
      %p239 = por %p237, %p238
      %p240 = scmp.ne.s32.totalorder %s231, %s232
      %p241 = scmp.eq.s32.totalorder %s27, 0
      %p242 = por %p240, %p241
      %p243 = scmp.ne.s32.totalorder %s231, %s232
      %p244 = scmp.eq.s32.totalorder %s28, 1
      %p245 = por %p243, %p244
      %p247 = scmp.ne.s32.totalorder %s232, %s246
      %p248 = scmp.eq.s32.totalorder %s28, 0
      %p249 = por %p247, %p248
      %s251 = sadd.s32 %s250, 1
      %p254 = scmp.eq.s32.totalorder %s22, 1
      %p255 = scmp.ne.s32.totalorder %s250, %s252
      %p256 = scmp.eq.s32.totalorder %s22, 0
      %p257 = por %p255, %p256
      %p258 = scmp.ne.s32.totalorder %s250, %s252
      %p259 = scmp.eq.s32.totalorder %s27, 1
      %p260 = por %p258, %p259
      %p261 = scmp.ne.s32.totalorder %s252, %s253
      %p262 = scmp.eq.s32.totalorder %s27, 0
      %p263 = por %p261, %p262
      %p264 = scmp.ne.s32.totalorder %s252, %s253
      %p265 = scmp.eq.s32.totalorder %s28, 1
      %p266 = por %p264, %p265
      %p268 = scmp.ne.s32.totalorder %s253, %s267
      %p269 = scmp.eq.s32.totalorder %s28, 0
      %p270 = por %p268, %p269
      %s272 = sadd.s32 %s271, 1
      %p275 = scmp.eq.s32.totalorder %s22, 1
      %p276 = scmp.ne.s32.totalorder %s271, %s273
      %p277 = scmp.eq.s32.totalorder %s22, 0
      %p278 = por %p276, %p277
      %p279 = scmp.ne.s32.totalorder %s271, %s273
      %p280 = scmp.eq.s32.totalorder %s27, 1
      %p281 = por %p279, %p280
      %p282 = scmp.ne.s32.totalorder %s273, %s274
      %p283 = scmp.eq.s32.totalorder %s27, 0
      %p284 = por %p282, %p283
      %p285 = scmp.ne.s32.totalorder %s273, %s274
      %p286 = scmp.eq.s32.totalorder %s28, 1
      %p287 = por %p285, %p286
      %p289 = scmp.ne.s32.totalorder %s274, %s288
      %p290 = scmp.eq.s32.totalorder %s28, 0
      %p291 = por %p289, %p290
      %s293 = sadd.s32 %s292, 1
      %p296 = scmp.eq.s32.totalorder %s22, 1
      %p297 = scmp.ne.s32.totalorder %s292, %s294
      %p298 = scmp.eq.s32.totalorder %s22, 0
      %p299 = por %p297, %p298
      %p300 = scmp.ne.s32.totalorder %s292, %s294
      %p301 = scmp.eq.s32.totalorder %s27, 1
      %p302 = por %p300, %p301
      %p303 = scmp.ne.s32.totalorder %s294, %s295
      %p304 = scmp.eq.s32.totalorder %s27, 0
      %p305 = por %p303, %p304
      %p306 = scmp.ne.s32.totalorder %s294, %s295
      %p307 = scmp.eq.s32.totalorder %s28, 1
      %p308 = por %p306, %p307
      %p310 = scmp.ne.s32.totalorder %s295, %s309
      %p311 = scmp.eq.s32.totalorder %s28, 0
      %p312 = por %p310, %p311
      %s313 = ssub.s32 %s22, %s29
      %p314 = scmp.eq.s32.totalorder %s313, 0
      %s316 = sadd.s32 %s315, 1
      %s317 = scalar_select %p314, %s315, %s316
      %p320 = pneg %p314
      %p321 = scmp.eq.s32.totalorder %s22, 1
      %p322 = por %p320, %p321
      %p323 = scmp.ne.s32.totalorder %s315, %s318
      %p324 = scmp.eq.s32.totalorder %s22, 0
      %p325 = por %p323, %p324
      %p326 = scmp.ne.s32.totalorder %s315, %s318
      %p327 = scmp.eq.s32.totalorder %s27, 1
      %p328 = por %p326, %p327
      %p329 = scmp.ne.s32.totalorder %s318, %s319
      %p330 = scmp.eq.s32.totalorder %s27, 0
      %p331 = por %p329, %p330
      %p332 = scmp.ne.s32.totalorder %s318, %s319
      %p333 = scmp.eq.s32.totalorder %s28, 1
      %p334 = por %p332, %p333
      %p336 = scmp.ne.s32.totalorder %s319, %s335
      %p337 = scmp.eq.s32.totalorder %s28, 0
      %p338 = por %p336, %p337
      %p339 = scmp.le.s32.totalorder 1, %s22
      %p340 = scmp.lt.s32.totalorder %s22, 3
      %p341 = pnand %p339, %p340
      %p342 = pneg %p341
      // Predicated region
      $region9: #{tpu_custom_call.1} parent=5 // pred_check
        _
      $region10: #{tpu_custom_call.1} parent=5 // pred_check_branch
        %344 = sbr.rel (%p341) target = $region12
      $region11: #{tpu_custom_call.1} parent=5 // pred_region
        %s345 = ssub.s32 %s22, 1
        // Predicated region
        $region13: #{tpu_custom_call.1} parent=11 // pred_check
          %p346 = pneg %p95
        $region14: #{tpu_custom_call.1} parent=11 // pred_check_branch
          %348 = sbr.rel (%p346) target = $region16
        $region15: #{tpu_custom_call.1} parent=11 // pred_region
          _
        $region16: #{tpu_custom_call.1} parent=11 // pred_fallthru
          _
        // Predicated region
        $region17: #{tpu_custom_call.1} parent=11 // pred_check
          %p349 = pneg %p116
        $region18: #{tpu_custom_call.1} parent=11 // pred_check_branch
          %351 = sbr.rel (%p349) target = $region20
        $region19: #{tpu_custom_call.1} parent=11 // pred_region
          _
        $region20: #{tpu_custom_call.1} parent=11 // pred_fallthru
          _
        // Predicated region
        $region21: #{tpu_custom_call.1} parent=11 // pred_check
          %p352 = pneg %p137
        $region22: #{tpu_custom_call.1} parent=11 // pred_check_branch
          %354 = sbr.rel (%p352) target = $region24
        $region23: #{tpu_custom_call.1} parent=11 // pred_region
          _
        $region24: #{tpu_custom_call.1} parent=11 // pred_fallthru
          _
        // Predicated region
        $region25: #{tpu_custom_call.1} parent=11 // pred_check
          %p355 = pneg %p158
        $region26: #{tpu_custom_call.1} parent=11 // pred_check_branch
          %357 = sbr.rel (%p355) target = $region28
        $region27: #{tpu_custom_call.1} parent=11 // pred_region
          _
        $region28: #{tpu_custom_call.1} parent=11 // pred_fallthru
          _
        // Predicated region
        $region29: #{tpu_custom_call.1} parent=11 // pred_check
          %p358 = pneg %p179
        $region30: #{tpu_custom_call.1} parent=11 // pred_check_branch
          %360 = sbr.rel (%p358) target = $region32
        $region31: #{tpu_custom_call.1} parent=11 // pred_region
          _
        $region32: #{tpu_custom_call.1} parent=11 // pred_fallthru
          _
        // Predicated region
        $region33: #{tpu_custom_call.1} parent=11 // pred_check
          %p361 = pneg %p200
        $region34: #{tpu_custom_call.1} parent=11 // pred_check_branch
          %363 = sbr.rel (%p361) target = $region36
        $region35: #{tpu_custom_call.1} parent=11 // pred_region
          _
        $region36: #{tpu_custom_call.1} parent=11 // pred_fallthru
          _
        // Predicated region
        $region37: #{tpu_custom_call.1} parent=11 // pred_check
          %p364 = pneg %p221
        $region38: #{tpu_custom_call.1} parent=11 // pred_check_branch
          %366 = sbr.rel (%p364) target = $region40
        $region39: #{tpu_custom_call.1} parent=11 // pred_region
          _
        $region40: #{tpu_custom_call.1} parent=11 // pred_fallthru
          _
        // Predicated region
        $region41: #{tpu_custom_call.1} parent=11 // pred_check
          %p367 = pneg %p242
        $region42: #{tpu_custom_call.1} parent=11 // pred_check_branch
          %369 = sbr.rel (%p367) target = $region44
        $region43: #{tpu_custom_call.1} parent=11 // pred_region
          _
        $region44: #{tpu_custom_call.1} parent=11 // pred_fallthru
          _
        // Predicated region
        $region45: #{tpu_custom_call.1} parent=11 // pred_check
          %p370 = pneg %p263
        $region46: #{tpu_custom_call.1} parent=11 // pred_check_branch
          %372 = sbr.rel (%p370) target = $region48
        $region47: #{tpu_custom_call.1} parent=11 // pred_region
          _
        $region48: #{tpu_custom_call.1} parent=11 // pred_fallthru
          _
        // Predicated region
        $region49: #{tpu_custom_call.1} parent=11 // pred_check
          %p373 = pneg %p284
        $region50: #{tpu_custom_call.1} parent=11 // pred_check_branch
          %375 = sbr.rel (%p373) target = $region52
        $region51: #{tpu_custom_call.1} parent=11 // pred_region
          _
        $region52: #{tpu_custom_call.1} parent=11 // pred_fallthru
          _
        // Predicated region
        $region53: #{tpu_custom_call.1} parent=11 // pred_check
          %p376 = pneg %p305
        $region54: #{tpu_custom_call.1} parent=11 // pred_check_branch
          %378 = sbr.rel (%p376) target = $region56
        $region55: #{tpu_custom_call.1} parent=11 // pred_region
          _
        $region56: #{tpu_custom_call.1} parent=11 // pred_fallthru
          _
      $region12: #{tpu_custom_call.1} parent=5 // pred_fallthru
        _
      %p379 = scmp.lt.s32.totalorder %s22, 2
      // Predicated region
      $region57: #{tpu_custom_call.1} parent=5 // pred_check
        %p380 = pneg %p379
      $region58: #{tpu_custom_call.1} parent=5 // pred_check_branch
        %382 = sbr.rel (%p380) target = $region60
      $region59: #{tpu_custom_call.1} parent=5 // pred_region
        // Predicated region
        $region61: #{tpu_custom_call.1} parent=59 // pred_check
          %p383 = pneg %p42
        $region62: #{tpu_custom_call.1} parent=59 // pred_check_branch
          %385 = sbr.rel (%p383) target = $region64
        $region63: #{tpu_custom_call.1} parent=59 // pred_region
          %s386 = smul.u32 4, %s22
          %p387 = scmp.lt.s32.totalorder %s386, 7
          %s388 = scalar_select %p387, %s386, 7
          %s389 = smul.addr %s388, 8
          %s390 = scalar_lea.vmem %s0, %s389
          %s391 = smul.u32 4, %s22
        $region64: #{tpu_custom_call.1} parent=59 // pred_fallthru
          _
        // Predicated region
        $region65: #{tpu_custom_call.1} parent=59 // pred_check
          %p392 = pneg %p68
        $region66: #{tpu_custom_call.1} parent=59 // pred_check_branch
          %394 = sbr.rel (%p392) target = $region68
        $region67: #{tpu_custom_call.1} parent=59 // pred_region
          %s395 = sand.u32 %s58, 1
          %s396 = sand.u32 %s58, 1
          %s397 = smul.addr %s396, 96
          %s398 = scalar_lea.vmem [#allocation2], %s397
          %s399 = smul.u32 4, %s22
          %s400 = smul.addr %s399, 8
          %s401 = scalar_lea.vmem %s1, %s400
          // Predicated region
          $region69: #{tpu_custom_call.1} parent=67 // pred_check
            _
          $region70: #{tpu_custom_call.1} parent=67 // pred_check_branch
            %403 = sbr.rel (0) target = $region72
          $region71: #{tpu_custom_call.1} parent=67 // pred_region
            // Predicated region
            $region73: #{tpu_custom_call.1} parent=71 // pred_check
              _
            $region74: #{tpu_custom_call.1} parent=71 // pred_check_branch
              %405 = sbr.rel (0) target = $region76
            $region75: #{tpu_custom_call.1} parent=71 // pred_region
              // Predicated region
              $region88: #{tpu_custom_call.1} parent=75 // pred_check
                _
              $region89: #{tpu_custom_call.1} parent=75 // pred_check_branch
                %443 = sbr.rel (0) target = $region91
              $region90: #{tpu_custom_call.1} parent=75 // pred_region
                loop: start=0, step=1, limit=1
                $region92: #{tpu_custom_call.1} parent=90 // loop_pre_header
                  _
                $region93: #{tpu_custom_call.1} parent=90 // loop_header
                  %s445 = sphi 0, %s449
                  %p446 = scmp.ge.s32.totalorder %s445, 1
                  %s450 = sphi %s401, %s401
                  %s451 = sphi %s398, %s398
                $region94: #{tpu_custom_call.1} parent=90 // loop_header_branch
                  %448 = sbr.rel (%p446) target = $region98
                $region95: #{tpu_custom_call.1} parent=90 // loop_body
                  %v452 = vld [vmem:[%s450] sm:$0xff]
                  %453 = vst [vmem:[%s451] sm:$0xff] %v452
                  %v454 = vld [vmem:[%s450 + $0x8] sm:$0xff]
                  %455 = vst [vmem:[%s451 + $0x8] sm:$0xff] %v454
                  %v456 = vld [vmem:[%s450 + $0x10] sm:$0xff]
                  %457 = vst [vmem:[%s451 + $0x10] sm:$0xff] %v456
                  %v458 = vld [vmem:[%s450 + $0x18] sm:$0xff]
                  %459 = vst [vmem:[%s451 + $0x18] sm:$0xff] %v458
                  %v460 = vld [vmem:[%s450 + $0x40] sm:$0xff]
                  %461 = vst [vmem:[%s451 + $0x20] sm:$0xff] %v460
                  %v462 = vld [vmem:[%s450 + $0x48] sm:$0xff]
                  %463 = vst [vmem:[%s451 + $0x28] sm:$0xff] %v462
                  %v464 = vld [vmem:[%s450 + $0x50] sm:$0xff]
                  %465 = vst [vmem:[%s451 + $0x30] sm:$0xff] %v464
                  %v466 = vld [vmem:[%s450 + $0x58] sm:$0xff]
                  %467 = vst [vmem:[%s451 + $0x38] sm:$0xff] %v466
                  %v468 = vld [vmem:[%s450 + $0x80] sm:$0xff]
                  %469 = vst [vmem:[%s451 + $0x40] sm:$0xff] %v468
                  %v470 = vld [vmem:[%s450 + $0x88] sm:$0xff]
                  %471 = vst [vmem:[%s451 + $0x48] sm:$0xff] %v470
                  %v472 = vld [vmem:[%s450 + $0x90] sm:$0xff]
                  %473 = vst [vmem:[%s451 + $0x50] sm:$0xff] %v472
                  %v474 = vld [vmem:[%s450 + $0x98] sm:$0xff]
                  %475 = vst [vmem:[%s451 + $0x58] sm:$0xff] %v474
                $region96: #{tpu_custom_call.1} parent=90 // loop_footer
                  %s449 = sadd.s32 1, %s445
                $region97: #{tpu_custom_call.1} parent=90 // loop_footer_branch
                  %444 = sbr.rel target = $region93
                $region98: #{tpu_custom_call.1} parent=90 // loop_exit
                  _
              $region91: #{tpu_custom_call.1} parent=75 // pred_fallthru
                _
              // Predicated region
              $region99: #{tpu_custom_call.1} parent=75 // pred_check
                _
              $region100: #{tpu_custom_call.1} parent=75 // pred_check_branch
                %477 = sbr.rel target = $region102
              $region101: #{tpu_custom_call.1} parent=75 // pred_region
                _
              $region102: #{tpu_custom_call.1} parent=75 // pred_fallthru
                _
            $region76: #{tpu_custom_call.1} parent=71 // pred_fallthru
              _
            // Predicated region
            $region77: #{tpu_custom_call.1} parent=71 // pred_check
              _
            $region78: #{tpu_custom_call.1} parent=71 // pred_check_branch
              %407 = sbr.rel target = $region80
            $region79: #{tpu_custom_call.1} parent=71 // pred_region
              %s409 = ssub.s32 256, 1
              loop: start=0, step=1, limit=1
              $region81: #{tpu_custom_call.1} parent=79 // loop_pre_header
                _
              $region82: #{tpu_custom_call.1} parent=79 // loop_header
                %s411 = sphi 0, %s415
                %p412 = scmp.ge.s32.totalorder %s411, 1
                %s416 = sphi %s401, %s401
                %s417 = sphi %s398, %s398
              $region83: #{tpu_custom_call.1} parent=79 // loop_header_branch
                %414 = sbr.rel (%p412) target = $region87
              $region84: #{tpu_custom_call.1} parent=79 // loop_body
                %v418 = vld [vmem:[%s416] sm:%s409]
                %419 = vst [vmem:[%s417] sm:%s409] %v418
                %v420 = vld [vmem:[%s416 + $0x8] sm:%s409]
                %421 = vst [vmem:[%s417 + $0x8] sm:%s409] %v420
                %v422 = vld [vmem:[%s416 + $0x10] sm:%s409]
                %423 = vst [vmem:[%s417 + $0x10] sm:%s409] %v422
                %v424 = vld [vmem:[%s416 + $0x18] sm:%s409]
                %425 = vst [vmem:[%s417 + $0x18] sm:%s409] %v424
                %v426 = vld [vmem:[%s416 + $0x40] sm:%s409]
                %427 = vst [vmem:[%s417 + $0x20] sm:%s409] %v426
                %v428 = vld [vmem:[%s416 + $0x48] sm:%s409]
                %429 = vst [vmem:[%s417 + $0x28] sm:%s409] %v428
                %v430 = vld [vmem:[%s416 + $0x50] sm:%s409]
                %431 = vst [vmem:[%s417 + $0x30] sm:%s409] %v430
                %v432 = vld [vmem:[%s416 + $0x58] sm:%s409]
                %433 = vst [vmem:[%s417 + $0x38] sm:%s409] %v432
                %v434 = vld [vmem:[%s416 + $0x80] sm:%s409]
                %435 = vst [vmem:[%s417 + $0x40] sm:%s409] %v434
                %v436 = vld [vmem:[%s416 + $0x88] sm:%s409]
                %437 = vst [vmem:[%s417 + $0x48] sm:%s409] %v436
                %v438 = vld [vmem:[%s416 + $0x90] sm:%s409]
                %439 = vst [vmem:[%s417 + $0x50] sm:%s409] %v438
                %v440 = vld [vmem:[%s416 + $0x98] sm:%s409]
                %441 = vst [vmem:[%s417 + $0x58] sm:%s409] %v440
              $region85: #{tpu_custom_call.1} parent=79 // loop_footer
                %s415 = sadd.s32 1, %s411
              $region86: #{tpu_custom_call.1} parent=79 // loop_footer_branch
                %410 = sbr.rel target = $region82
              $region87: #{tpu_custom_call.1} parent=79 // loop_exit
                _
            $region80: #{tpu_custom_call.1} parent=71 // pred_fallthru
              _
          $region72: #{tpu_custom_call.1} parent=67 // pred_fallthru
            _
          %478 = vnop
        $region68: #{tpu_custom_call.1} parent=59 // pred_fallthru
          _
      $region60: #{tpu_custom_call.1} parent=5 // pred_fallthru
        _
      %p479 = scmp.le.s32.totalorder 1, %s22
      %p480 = scmp.lt.s32.totalorder %s22, 3
      %p481 = pnand %p479, %p480
      %p482 = pneg %p481
      // Predicated region
      $region103: #{tpu_custom_call.1} parent=5 // pred_check
        _
      $region104: #{tpu_custom_call.1} parent=5 // pred_check_branch
        %484 = sbr.rel (%p481) target = $region106
      $region105: #{tpu_custom_call.1} parent=5 // pred_region
        %s485 = ssub.s32 %s22, 1
        %s486 = sand.u32 %s61, 1
        %s487 = sand.u32 %s61, 1
        %s488 = smul.addr %s487, 96
        %s489 = scalar_lea.vmem [#allocation2], %s488
        // Predicated region
        $region107: #{tpu_custom_call.1} parent=105 // pred_check
          %p490 = pneg %p74
        $region108: #{tpu_custom_call.1} parent=105 // pred_check_branch
          %492 = sbr.rel (%p490) target = $region110
        $region109: #{tpu_custom_call.1} parent=105 // pred_region
          _
        $region110: #{tpu_custom_call.1} parent=105 // pred_fallthru
          _
        %s493 = smul.u32 4, %s27
        %p494 = scmp.lt.s32.totalorder %s493, 7
        %s495 = scalar_select %p494, %s493, 7
        %s496 = smul.addr %s495, 8
        %s497 = scalar_lea.vmem %s0, %s496
        %p498 = pneg %p48
        %p499 = pneg %p45
        %s500 = sand.u32 %s61, 1
        %s501 = sand.u32 %s61, 1
        %s502 = smul.addr %s501, 96
        %s503 = scalar_lea.vmem [#allocation2], %s502
        %p504 = pneg %p74
        %p505 = pneg %p71
        %p506 = pneg %p95
        %p507 = pneg %p92
        %p508 = pneg %p116
        %p509 = pneg %p113
        %p510 = pneg %p137
        %p511 = pneg %p134
        %p512 = pneg %p158
        %p513 = pneg %p155
        %p514 = pneg %p179
        %p515 = pneg %p176
        %p516 = pneg %p200
        %p517 = pneg %p197
        %p518 = pneg %p221
        %p519 = pneg %p218
        %p520 = pneg %p242
        %p521 = pneg %p239
        %p522 = pneg %p263
        %p523 = pneg %p260
        %p524 = pneg %p284
        %p525 = pneg %p281
        %p526 = pneg %p305
        %p527 = pneg %p302
        %p528 = pneg %p331
        %p529 = pneg %p328
        %s530 = sand.u32 %s318, 1
        %s531 = scalar_lea.sflag [#allocation4], %s530
        %s532 = sand.u32 %s318, 1
        %s533 = smul.addr %s532, 32
        %s534 = scalar_lea.vmem [#allocation3], %s533
        %s535 = smul.u32 4, %s27
        %p536 = scmp.lt.s32.totalorder %s535, 7
        %s537 = scalar_select %p536, %s535, 7
        %s538 = smul.addr %s537, 8
        %s539 = scalar_lea.vmem %s0, %s538
        %s540 = smul.u32 4, %s27
        %s541 = smul.u32 4, %s27
        %s542 = smul.u32 4, %s27
        %v543 = vld [vmem:[%s539] sm:$0xff]
        %v544 = vld [vmem:[%s539 + $0x8] sm:$0xff]
        %v545 = vld [vmem:[%s539 + $0x10] sm:$0xff]
        %v546 = vld [vmem:[%s539 + $0x18] sm:$0xff]
        %v547 = vld [vmem:[%s489] sm:$0xff]
        %v548 = vld [vmem:[%s489 + $0x8] sm:$0xff]
        %v549 = vld [vmem:[%s489 + $0x10] sm:$0xff]
        %v550 = vld [vmem:[%s489 + $0x18] sm:$0xff]
        %s551 = scalar_lea.vmem %s489, 32 [#allocation2]
        %v552 = vld [vmem:[%s551] sm:$0xff]
        %v553 = vld [vmem:[%s551 + $0x8] sm:$0xff]
        %v554 = vld [vmem:[%s551 + $0x10] sm:$0xff]
        %v555 = vld [vmem:[%s551 + $0x18] sm:$0xff]
        %s556 = scalar_lea.vmem %s489, 64 [#allocation2]
        %v557 = vld [vmem:[%s556] sm:$0xff]
        %v558 = vld [vmem:[%s556 + $0x8] sm:$0xff]
        %v559 = vld [vmem:[%s556 + $0x10] sm:$0xff]
        %v560 = vld [vmem:[%s556 + $0x18] sm:$0xff]
        %v561 = vld [vmem:[%s2] sm:$0xff]
        %v562 = vld [vmem:[%s2 + $0x8] sm:$0xff]
        %v563 = vld [vmem:[%s2 + $0x10] sm:$0xff]
        %v564 = vld [vmem:[%s2 + $0x18] sm:$0xff]
        %v565 = vld [vmem:[%s3] sm:$0xff]
        %v566 = vld [vmem:[%s3 + $0x8] sm:$0xff]
        %v567 = vld [vmem:[%s3 + $0x10] sm:$0xff]
        %v568 = vld [vmem:[%s3 + $0x18] sm:$0xff]
        %vm569 = vcmask 261120
        %v571 = vsel %vm569, %v547, 0
        %v574 = vsel %vm569, %v548, 0
        %v577 = vsel %vm569, %v549, 0
        %v580 = vsel %vm569, %v550, 0
        %582 = vmatprep.subr.mxu0 0.0
        %583 = vmatpush1.msra.mxu0 0.0
        %584 = vmatprep.subr.mxu0 0.0
        %585 = vmatpush1.msra.mxu0 0.0
        %586 = vmatprep.subr.mxu0 0.0
        %587 = vmatpush1.msra.mxu0 0.0
        %588 = vmatprep.subr.mxu0 0.0
        %589 = vmatpush1.msra.mxu0 0.0
        %590 = vmatprep.subr.mxu0 0.0
        %591 = vmatpush1.msra.mxu0 0.0
        %592 = vmatprep.subr.mxu0 0.0
        %593 = vmatpush1.msra.mxu0 0.0
        %594 = vmatprep.subr.mxu0 0.0
        %595 = vmatpush1.msra.mxu0 0.0
        %596 = vmatprep.subr.mxu0 0.0
        %597 = vmatpush1.msra.mxu0 0.0
        %598 = vmatprep.subr.mxu0 0.0
        %599 = vmatpush1.msra.mxu0 0.0
        %600 = vmatprep.subr.mxu0 0.0
        %601 = vmatpush1.msra.mxu0 0.0
        %602 = vmatprep.subr.mxu0 0.0
        %603 = vmatpush1.msra.mxu0 0.0
        %604 = vmatprep.subr.mxu0 0.0
        %605 = vmatpush1.msra.mxu0 0.0
        %606 = vmatprep.subr.mxu0 0.0
        %607 = vmatpush1.msra.mxu0 %v564
        %608 = vmatprep.subr.mxu0 0.0
        %609 = vmatpush1.msra.mxu0 %v563
        %610 = vmatprep.subr.mxu0 0.0
        %611 = vmatpush1.msra.mxu0 %v562
        %612 = vmatprep.subr.mxu0 0.0
        %613 = vmatpush1.msra.mxu0 %v561
        %614 = vmatprep.subr.mxu0 0.0
        %615 = vmatpush2.msra.mxu0 0.0
        %616 = vmatprep.subr.mxu0 0.0
        %617 = vmatpush2.msra.mxu0 0.0
        %618 = vmatprep.subr.mxu0 0.0
        %619 = vmatpush2.msra.mxu0 0.0
        %620 = vmatprep.subr.mxu0 0.0
        %621 = vmatpush2.msra.mxu0 0.0
        %622 = vmatprep.subr.mxu0 0.0
        %623 = vmatpush2.msra.mxu0 0.0
        %624 = vmatprep.subr.mxu0 0.0
        %625 = vmatpush2.msra.mxu0 0.0
        %626 = vmatprep.subr.mxu0 0.0
        %627 = vmatpush2.msra.mxu0 0.0
        %628 = vmatprep.subr.mxu0 0.0
        %629 = vmatpush2.msra.mxu0 0.0
        %630 = vmatprep.subr.mxu0 0.0
        %631 = vmatpush2.msra.mxu0 0.0
        %632 = vmatprep.subr.mxu0 0.0
        %633 = vmatpush2.msra.mxu0 0.0
        %634 = vmatprep.subr.mxu0 0.0
        %635 = vmatpush2.msra.mxu0 0.0
        %636 = vmatprep.subr.mxu0 0.0
        %637 = vmatpush2.msra.mxu0 0.0
        %638 = vmatprep.subr.mxu0 0.0
        %639 = vmatpush2.msra.mxu0 0.0
        %640 = vmatprep.subr.mxu0 0.0
        %641 = vmatpush2.msra.mxu0 0.0
        %642 = vmatprep.subr.mxu0 0.0
        %643 = vmatpush2.msra.mxu0 0.0
        %644 = vmatprep.subr.mxu0 0.0
        %645 = vmatpush2.msra.mxu0 0.0
        %646 = vmatprep.mubr.f32.mxu0 0.0
        %647 = vmatmul.mubr.f32.gmra.mxu0 %v571
        %v648 = vpop.f32.mrf.mxu0
        %v649 = vadd.f32 0.0, %v648
        %v650 = vpop.f32.mrf.mxu0
        %651 = vmatprep.mubr.f32.mxu0 0.0
        %652 = vmatmul.mubr.f32.gmra.mxu0 %v574
        %v653 = vpop.f32.mrf.mxu0
        %v654 = vadd.f32 0.0, %v653
        %v655 = vpop.f32.mrf.mxu0
        %656 = vmatprep.mubr.f32.mxu0 0.0
        %657 = vmatmul.mubr.f32.gmra.mxu0 %v577
        %v658 = vpop.f32.mrf.mxu0
        %v659 = vadd.f32 0.0, %v658
        %v660 = vpop.f32.mrf.mxu0
        %661 = vmatprep.mubr.f32.mxu0 0.0
        %662 = vmatmul.mubr.f32.gmra.mxu0 %v580
        %v663 = vpop.f32.mrf.mxu0
        %v664 = vadd.f32 0.0, %v663
        %v665 = vpop.f32.mrf.mxu0
        %666 = vdwg.mxu0
        %v668 = vsel %vm569, %v552, 0
        %v671 = vsel %vm569, %v553, 0
        %v674 = vsel %vm569, %v554, 0
        %v677 = vsel %vm569, %v555, 0
        %679 = vmatprep.subr.mxu0 0.0
        %680 = vmatpush1.msra.mxu0 0.0
        %681 = vmatprep.subr.mxu0 0.0
        %682 = vmatpush1.msra.mxu0 0.0
        %683 = vmatprep.subr.mxu0 0.0
        %684 = vmatpush1.msra.mxu0 0.0
        %685 = vmatprep.subr.mxu0 0.0
        %686 = vmatpush1.msra.mxu0 0.0
        %687 = vmatprep.subr.mxu0 0.0
        %688 = vmatpush1.msra.mxu0 0.0
        %689 = vmatprep.subr.mxu0 0.0
        %690 = vmatpush1.msra.mxu0 0.0
        %691 = vmatprep.subr.mxu0 0.0
        %692 = vmatpush1.msra.mxu0 0.0
        %693 = vmatprep.subr.mxu0 0.0
        %694 = vmatpush1.msra.mxu0 0.0
        %695 = vmatprep.subr.mxu0 0.0
        %696 = vmatpush1.msra.mxu0 0.0
        %697 = vmatprep.subr.mxu0 0.0
        %698 = vmatpush1.msra.mxu0 0.0
        %699 = vmatprep.subr.mxu0 0.0
        %700 = vmatpush1.msra.mxu0 0.0
        %701 = vmatprep.subr.mxu0 0.0
        %702 = vmatpush1.msra.mxu0 0.0
        %703 = vmatprep.subr.mxu0 0.0
        %704 = vmatpush1.msra.mxu0 %v564
        %705 = vmatprep.subr.mxu0 0.0
        %706 = vmatpush1.msra.mxu0 %v563
        %707 = vmatprep.subr.mxu0 0.0
        %708 = vmatpush1.msra.mxu0 %v562
        %709 = vmatprep.subr.mxu0 0.0
        %710 = vmatpush1.msra.mxu0 %v561
        %711 = vmatprep.subr.mxu0 0.0
        %712 = vmatpush2.msra.mxu0 0.0
        %713 = vmatprep.subr.mxu0 0.0
        %714 = vmatpush2.msra.mxu0 0.0
        %715 = vmatprep.subr.mxu0 0.0
        %716 = vmatpush2.msra.mxu0 0.0
        %717 = vmatprep.subr.mxu0 0.0
        %718 = vmatpush2.msra.mxu0 0.0
        %719 = vmatprep.subr.mxu0 0.0
        %720 = vmatpush2.msra.mxu0 0.0
        %721 = vmatprep.subr.mxu0 0.0
        %722 = vmatpush2.msra.mxu0 0.0
        %723 = vmatprep.subr.mxu0 0.0
        %724 = vmatpush2.msra.mxu0 0.0
        %725 = vmatprep.subr.mxu0 0.0
        %726 = vmatpush2.msra.mxu0 0.0
        %727 = vmatprep.subr.mxu0 0.0
        %728 = vmatpush2.msra.mxu0 0.0
        %729 = vmatprep.subr.mxu0 0.0
        %730 = vmatpush2.msra.mxu0 0.0
        %731 = vmatprep.subr.mxu0 0.0
        %732 = vmatpush2.msra.mxu0 0.0
        %733 = vmatprep.subr.mxu0 0.0
        %734 = vmatpush2.msra.mxu0 0.0
        %735 = vmatprep.subr.mxu0 0.0
        %736 = vmatpush2.msra.mxu0 0.0
        %737 = vmatprep.subr.mxu0 0.0
        %738 = vmatpush2.msra.mxu0 0.0
        %739 = vmatprep.subr.mxu0 0.0
        %740 = vmatpush2.msra.mxu0 0.0
        %741 = vmatprep.subr.mxu0 0.0
        %742 = vmatpush2.msra.mxu0 0.0
        %743 = vmatprep.mubr.f32.mxu0 0.0
        %744 = vmatmul.mubr.f32.gmra.mxu0 %v668
        %v745 = vpop.f32.mrf.mxu0
        %v746 = vadd.f32 0.0, %v745
        %v747 = vpop.f32.mrf.mxu0
        %748 = vmatprep.mubr.f32.mxu0 0.0
        %749 = vmatmul.mubr.f32.gmra.mxu0 %v671
        %v750 = vpop.f32.mrf.mxu0
        %v751 = vadd.f32 0.0, %v750
        %v752 = vpop.f32.mrf.mxu0
        %753 = vmatprep.mubr.f32.mxu0 0.0
        %754 = vmatmul.mubr.f32.gmra.mxu0 %v674
        %v755 = vpop.f32.mrf.mxu0
        %v756 = vadd.f32 0.0, %v755
        %v757 = vpop.f32.mrf.mxu0
        %758 = vmatprep.mubr.f32.mxu0 0.0
        %759 = vmatmul.mubr.f32.gmra.mxu0 %v677
        %v760 = vpop.f32.mrf.mxu0
        %v761 = vadd.f32 0.0, %v760
        %v762 = vpop.f32.mrf.mxu0
        %763 = vdwg.mxu0
        %v765 = vsel %vm569, %v557, 0
        %v768 = vsel %vm569, %v558, 0
        %v771 = vsel %vm569, %v559, 0
        %v774 = vsel %vm569, %v560, 0
        %776 = vmatprep.subr.mxu0 0.0
        %777 = vmatpush1.msra.mxu0 0.0
        %778 = vmatprep.subr.mxu0 0.0
        %779 = vmatpush1.msra.mxu0 0.0
        %780 = vmatprep.subr.mxu0 0.0
        %781 = vmatpush1.msra.mxu0 0.0
        %782 = vmatprep.subr.mxu0 0.0
        %783 = vmatpush1.msra.mxu0 0.0
        %784 = vmatprep.subr.mxu0 0.0
        %785 = vmatpush1.msra.mxu0 0.0
        %786 = vmatprep.subr.mxu0 0.0
        %787 = vmatpush1.msra.mxu0 0.0
        %788 = vmatprep.subr.mxu0 0.0
        %789 = vmatpush1.msra.mxu0 0.0
        %790 = vmatprep.subr.mxu0 0.0
        %791 = vmatpush1.msra.mxu0 0.0
        %792 = vmatprep.subr.mxu0 0.0
        %793 = vmatpush1.msra.mxu0 0.0
        %794 = vmatprep.subr.mxu0 0.0
        %795 = vmatpush1.msra.mxu0 0.0
        %796 = vmatprep.subr.mxu0 0.0
        %797 = vmatpush1.msra.mxu0 0.0
        %798 = vmatprep.subr.mxu0 0.0
        %799 = vmatpush1.msra.mxu0 0.0
        %800 = vmatprep.subr.mxu0 0.0
        %801 = vmatpush1.msra.mxu0 %v564
        %802 = vmatprep.subr.mxu0 0.0
        %803 = vmatpush1.msra.mxu0 %v563
        %804 = vmatprep.subr.mxu0 0.0
        %805 = vmatpush1.msra.mxu0 %v562
        %806 = vmatprep.subr.mxu0 0.0
        %807 = vmatpush1.msra.mxu0 %v561
        %808 = vmatprep.subr.mxu0 0.0
        %809 = vmatpush2.msra.mxu0 0.0
        %810 = vmatprep.subr.mxu0 0.0
        %811 = vmatpush2.msra.mxu0 0.0
        %812 = vmatprep.subr.mxu0 0.0
        %813 = vmatpush2.msra.mxu0 0.0
        %814 = vmatprep.subr.mxu0 0.0
        %815 = vmatpush2.msra.mxu0 0.0
        %816 = vmatprep.subr.mxu0 0.0
        %817 = vmatpush2.msra.mxu0 0.0
        %818 = vmatprep.subr.mxu0 0.0
        %819 = vmatpush2.msra.mxu0 0.0
        %820 = vmatprep.subr.mxu0 0.0
        %821 = vmatpush2.msra.mxu0 0.0
        %822 = vmatprep.subr.mxu0 0.0
        %823 = vmatpush2.msra.mxu0 0.0
        %824 = vmatprep.subr.mxu0 0.0
        %825 = vmatpush2.msra.mxu0 0.0
        %826 = vmatprep.subr.mxu0 0.0
        %827 = vmatpush2.msra.mxu0 0.0
        %828 = vmatprep.subr.mxu0 0.0
        %829 = vmatpush2.msra.mxu0 0.0
        %830 = vmatprep.subr.mxu0 0.0
        %831 = vmatpush2.msra.mxu0 0.0
        %832 = vmatprep.subr.mxu0 0.0
        %833 = vmatpush2.msra.mxu0 0.0
        %834 = vmatprep.subr.mxu0 0.0
        %835 = vmatpush2.msra.mxu0 0.0
        %836 = vmatprep.subr.mxu0 0.0
        %837 = vmatpush2.msra.mxu0 0.0
        %838 = vmatprep.subr.mxu0 0.0
        %839 = vmatpush2.msra.mxu0 0.0
        %840 = vmatprep.mubr.f32.mxu0 0.0
        %841 = vmatmul.mubr.f32.gmra.mxu0 %v765
        %v842 = vpop.f32.mrf.mxu0
        %v843 = vadd.f32 0.0, %v842
        %v844 = vpop.f32.mrf.mxu0
        %845 = vmatprep.mubr.f32.mxu0 0.0
        %846 = vmatmul.mubr.f32.gmra.mxu0 %v768
        %v847 = vpop.f32.mrf.mxu0
        %v848 = vadd.f32 0.0, %v847
        %v849 = vpop.f32.mrf.mxu0
        %850 = vmatprep.mubr.f32.mxu0 0.0
        %851 = vmatmul.mubr.f32.gmra.mxu0 %v771
        %v852 = vpop.f32.mrf.mxu0
        %v853 = vadd.f32 0.0, %v852
        %v854 = vpop.f32.mrf.mxu0
        %855 = vmatprep.mubr.f32.mxu0 0.0
        %856 = vmatmul.mubr.f32.gmra.mxu0 %v774
        %v857 = vpop.f32.mrf.mxu0
        %v858 = vadd.f32 0.0, %v857
        %v859 = vpop.f32.mrf.mxu0
        %860 = vdwg.mxu0
        %861 = vmatprep.subr.mxu0 0.0
        %862 = vmatpush1.msra.mxu0 0.0
        %863 = vmatprep.subr.mxu0 0.0
        %864 = vmatpush1.msra.mxu0 0.0
        %865 = vmatprep.subr.mxu0 0.0
        %866 = vmatpush1.msra.mxu0 0.0
        %867 = vmatprep.subr.mxu0 0.0
        %868 = vmatpush1.msra.mxu0 0.0
        %869 = vmatprep.subr.mxu0 0.0
        %870 = vmatpush1.msra.mxu0 0.0
        %871 = vmatprep.subr.mxu0 0.0
        %872 = vmatpush1.msra.mxu0 0.0
        %873 = vmatprep.subr.mxu0 0.0
        %874 = vmatpush1.msra.mxu0 0.0
        %875 = vmatprep.subr.mxu0 0.0
        %876 = vmatpush1.msra.mxu0 0.0
        %877 = vmatprep.subr.mxu0 0.0
        %878 = vmatpush1.msra.mxu0 0.0
        %879 = vmatprep.subr.mxu0 0.0
        %880 = vmatpush1.msra.mxu0 0.0
        %881 = vmatprep.subr.mxu0 0.0
        %882 = vmatpush1.msra.mxu0 0.0
        %883 = vmatprep.subr.mxu0 0.0
        %884 = vmatpush1.msra.mxu0 0.0
        %885 = vmatprep.subr.mxu0 0.0
        %886 = vmatpush1.msra.mxu0 %v568
        %887 = vmatprep.subr.mxu0 0.0
        %888 = vmatpush1.msra.mxu0 %v567
        %889 = vmatprep.subr.mxu0 0.0
        %890 = vmatpush1.msra.mxu0 %v566
        %891 = vmatprep.subr.mxu0 0.0
        %892 = vmatpush1.msra.mxu0 %v565
        %893 = vmatprep.subr.mxu0 0.0
        %894 = vmatpush2.msra.mxu0 0.0
        %895 = vmatprep.subr.mxu0 0.0
        %896 = vmatpush2.msra.mxu0 0.0
        %897 = vmatprep.subr.mxu0 0.0
        %898 = vmatpush2.msra.mxu0 0.0
        %899 = vmatprep.subr.mxu0 0.0
        %900 = vmatpush2.msra.mxu0 0.0
        %901 = vmatprep.subr.mxu0 0.0
        %902 = vmatpush2.msra.mxu0 0.0
        %903 = vmatprep.subr.mxu0 0.0
        %904 = vmatpush2.msra.mxu0 0.0
        %905 = vmatprep.subr.mxu0 0.0
        %906 = vmatpush2.msra.mxu0 0.0
        %907 = vmatprep.subr.mxu0 0.0
        %908 = vmatpush2.msra.mxu0 0.0
        %909 = vmatprep.subr.mxu0 0.0
        %910 = vmatpush2.msra.mxu0 0.0
        %911 = vmatprep.subr.mxu0 0.0
        %912 = vmatpush2.msra.mxu0 0.0
        %913 = vmatprep.subr.mxu0 0.0
        %914 = vmatpush2.msra.mxu0 0.0
        %915 = vmatprep.subr.mxu0 0.0
        %916 = vmatpush2.msra.mxu0 0.0
        %917 = vmatprep.subr.mxu0 0.0
        %918 = vmatpush2.msra.mxu0 0.0
        %919 = vmatprep.subr.mxu0 0.0
        %920 = vmatpush2.msra.mxu0 0.0
        %921 = vmatprep.subr.mxu0 0.0
        %922 = vmatpush2.msra.mxu0 0.0
        %923 = vmatprep.subr.mxu0 0.0
        %924 = vmatpush2.msra.mxu0 0.0
        %925 = vmatprep.mubr.f32.mxu0 0.0
        %926 = vmatmul.mubr.f32.gmra.mxu0 %v571
        %v927 = vpop.f32.mrf.mxu0
        %v928 = vadd.f32 0.0, %v927
        %v929 = vpop.f32.mrf.mxu0
        %930 = vmatprep.mubr.f32.mxu0 0.0
        %931 = vmatmul.mubr.f32.gmra.mxu0 %v574
        %v932 = vpop.f32.mrf.mxu0
        %v933 = vadd.f32 0.0, %v932
        %v934 = vpop.f32.mrf.mxu0
        %935 = vmatprep.mubr.f32.mxu0 0.0
        %936 = vmatmul.mubr.f32.gmra.mxu0 %v577
        %v937 = vpop.f32.mrf.mxu0
        %v938 = vadd.f32 0.0, %v937
        %v939 = vpop.f32.mrf.mxu0
        %940 = vmatprep.mubr.f32.mxu0 0.0
        %941 = vmatmul.mubr.f32.gmra.mxu0 %v580
        %v942 = vpop.f32.mrf.mxu0
        %v943 = vadd.f32 0.0, %v942
        %v944 = vpop.f32.mrf.mxu0
        %945 = vdwg.mxu0
        %946 = vmatprep.subr.mxu0 0.0
        %947 = vmatpush1.msra.mxu0 0.0
        %948 = vmatprep.subr.mxu0 0.0
        %949 = vmatpush1.msra.mxu0 0.0
        %950 = vmatprep.subr.mxu0 0.0
        %951 = vmatpush1.msra.mxu0 0.0
        %952 = vmatprep.subr.mxu0 0.0
        %953 = vmatpush1.msra.mxu0 0.0
        %954 = vmatprep.subr.mxu0 0.0
        %955 = vmatpush1.msra.mxu0 0.0
        %956 = vmatprep.subr.mxu0 0.0
        %957 = vmatpush1.msra.mxu0 0.0
        %958 = vmatprep.subr.mxu0 0.0
        %959 = vmatpush1.msra.mxu0 0.0
        %960 = vmatprep.subr.mxu0 0.0
        %961 = vmatpush1.msra.mxu0 0.0
        %962 = vmatprep.subr.mxu0 0.0
        %963 = vmatpush1.msra.mxu0 0.0
        %964 = vmatprep.subr.mxu0 0.0
        %965 = vmatpush1.msra.mxu0 0.0
        %966 = vmatprep.subr.mxu0 0.0
        %967 = vmatpush1.msra.mxu0 0.0
        %968 = vmatprep.subr.mxu0 0.0
        %969 = vmatpush1.msra.mxu0 0.0
        %970 = vmatprep.subr.mxu0 0.0
        %971 = vmatpush1.msra.mxu0 %v568
        %972 = vmatprep.subr.mxu0 0.0
        %973 = vmatpush1.msra.mxu0 %v567
        %974 = vmatprep.subr.mxu0 0.0
        %975 = vmatpush1.msra.mxu0 %v566
        %976 = vmatprep.subr.mxu0 0.0
        %977 = vmatpush1.msra.mxu0 %v565
        %978 = vmatprep.subr.mxu0 0.0
        %979 = vmatpush2.msra.mxu0 0.0
        %980 = vmatprep.subr.mxu0 0.0
        %981 = vmatpush2.msra.mxu0 0.0
        %982 = vmatprep.subr.mxu0 0.0
        %983 = vmatpush2.msra.mxu0 0.0
        %984 = vmatprep.subr.mxu0 0.0
        %985 = vmatpush2.msra.mxu0 0.0
        %986 = vmatprep.subr.mxu0 0.0
        %987 = vmatpush2.msra.mxu0 0.0
        %988 = vmatprep.subr.mxu0 0.0
        %989 = vmatpush2.msra.mxu0 0.0
        %990 = vmatprep.subr.mxu0 0.0
        %991 = vmatpush2.msra.mxu0 0.0
        %992 = vmatprep.subr.mxu0 0.0
        %993 = vmatpush2.msra.mxu0 0.0
        %994 = vmatprep.subr.mxu0 0.0
        %995 = vmatpush2.msra.mxu0 0.0
        %996 = vmatprep.subr.mxu0 0.0
        %997 = vmatpush2.msra.mxu0 0.0
        %998 = vmatprep.subr.mxu0 0.0
        %999 = vmatpush2.msra.mxu0 0.0
        %1000 = vmatprep.subr.mxu0 0.0
        %1001 = vmatpush2.msra.mxu0 0.0
        %1002 = vmatprep.subr.mxu0 0.0
        %1003 = vmatpush2.msra.mxu0 0.0
        %1004 = vmatprep.subr.mxu0 0.0
        %1005 = vmatpush2.msra.mxu0 0.0
        %1006 = vmatprep.subr.mxu0 0.0
        %1007 = vmatpush2.msra.mxu0 0.0
        %1008 = vmatprep.subr.mxu0 0.0
        %1009 = vmatpush2.msra.mxu0 0.0
        %1010 = vmatprep.mubr.f32.mxu0 0.0
        %1011 = vmatmul.mubr.f32.gmra.mxu0 %v668
        %v1012 = vpop.f32.mrf.mxu0
        %v1013 = vadd.f32 0.0, %v1012
        %v1014 = vpop.f32.mrf.mxu0
        %1015 = vmatprep.mubr.f32.mxu0 0.0
        %1016 = vmatmul.mubr.f32.gmra.mxu0 %v671
        %v1017 = vpop.f32.mrf.mxu0
        %v1018 = vadd.f32 0.0, %v1017
        %v1019 = vpop.f32.mrf.mxu0
        %1020 = vmatprep.mubr.f32.mxu0 0.0
        %1021 = vmatmul.mubr.f32.gmra.mxu0 %v674
        %v1022 = vpop.f32.mrf.mxu0
        %v1023 = vadd.f32 0.0, %v1022
        %v1024 = vpop.f32.mrf.mxu0
        %1025 = vmatprep.mubr.f32.mxu0 0.0
        %1026 = vmatmul.mubr.f32.gmra.mxu0 %v677
        %v1027 = vpop.f32.mrf.mxu0
        %v1028 = vadd.f32 0.0, %v1027
        %v1029 = vpop.f32.mrf.mxu0
        %1030 = vdwg.mxu0
        %1031 = vmatprep.subr.mxu0 0.0
        %1032 = vmatpush1.msra.mxu0 0.0
        %1033 = vmatprep.subr.mxu0 0.0
        %1034 = vmatpush1.msra.mxu0 0.0
        %1035 = vmatprep.subr.mxu0 0.0
        %1036 = vmatpush1.msra.mxu0 0.0
        %1037 = vmatprep.subr.mxu0 0.0
        %1038 = vmatpush1.msra.mxu0 0.0
        %1039 = vmatprep.subr.mxu0 0.0
        %1040 = vmatpush1.msra.mxu0 0.0
        %1041 = vmatprep.subr.mxu0 0.0
        %1042 = vmatpush1.msra.mxu0 0.0
        %1043 = vmatprep.subr.mxu0 0.0
        %1044 = vmatpush1.msra.mxu0 0.0
        %1045 = vmatprep.subr.mxu0 0.0
        %1046 = vmatpush1.msra.mxu0 0.0
        %1047 = vmatprep.subr.mxu0 0.0
        %1048 = vmatpush1.msra.mxu0 0.0
        %1049 = vmatprep.subr.mxu0 0.0
        %1050 = vmatpush1.msra.mxu0 0.0
        %1051 = vmatprep.subr.mxu0 0.0
        %1052 = vmatpush1.msra.mxu0 0.0
        %1053 = vmatprep.subr.mxu0 0.0
        %1054 = vmatpush1.msra.mxu0 0.0
        %1055 = vmatprep.subr.mxu0 0.0
        %1056 = vmatpush1.msra.mxu0 %v568
        %1057 = vmatprep.subr.mxu0 0.0
        %1058 = vmatpush1.msra.mxu0 %v567
        %1059 = vmatprep.subr.mxu0 0.0
        %1060 = vmatpush1.msra.mxu0 %v566
        %1061 = vmatprep.subr.mxu0 0.0
        %1062 = vmatpush1.msra.mxu0 %v565
        %1063 = vmatprep.subr.mxu0 0.0
        %1064 = vmatpush2.msra.mxu0 0.0
        %1065 = vmatprep.subr.mxu0 0.0
        %1066 = vmatpush2.msra.mxu0 0.0
        %1067 = vmatprep.subr.mxu0 0.0
        %1068 = vmatpush2.msra.mxu0 0.0
        %1069 = vmatprep.subr.mxu0 0.0
        %1070 = vmatpush2.msra.mxu0 0.0
        %1071 = vmatprep.subr.mxu0 0.0
        %1072 = vmatpush2.msra.mxu0 0.0
        %1073 = vmatprep.subr.mxu0 0.0
        %1074 = vmatpush2.msra.mxu0 0.0
        %1075 = vmatprep.subr.mxu0 0.0
        %1076 = vmatpush2.msra.mxu0 0.0
        %1077 = vmatprep.subr.mxu0 0.0
        %1078 = vmatpush2.msra.mxu0 0.0
        %1079 = vmatprep.subr.mxu0 0.0
        %1080 = vmatpush2.msra.mxu0 0.0
        %1081 = vmatprep.subr.mxu0 0.0
        %1082 = vmatpush2.msra.mxu0 0.0
        %1083 = vmatprep.subr.mxu0 0.0
        %1084 = vmatpush2.msra.mxu0 0.0
        %1085 = vmatprep.subr.mxu0 0.0
        %1086 = vmatpush2.msra.mxu0 0.0
        %1087 = vmatprep.subr.mxu0 0.0
        %1088 = vmatpush2.msra.mxu0 0.0
        %1089 = vmatprep.subr.mxu0 0.0
        %1090 = vmatpush2.msra.mxu0 0.0
        %1091 = vmatprep.subr.mxu0 0.0
        %1092 = vmatpush2.msra.mxu0 0.0
        %1093 = vmatprep.subr.mxu0 0.0
        %1094 = vmatpush2.msra.mxu0 0.0
        %1095 = vmatprep.mubr.f32.mxu0 0.0
        %1096 = vmatmul.mubr.f32.gmra.mxu0 %v765
        %v1097 = vpop.f32.mrf.mxu0
        %v1098 = vadd.f32 0.0, %v1097
        %v1099 = vpop.f32.mrf.mxu0
        %1100 = vmatprep.mubr.f32.mxu0 0.0
        %1101 = vmatmul.mubr.f32.gmra.mxu0 %v768
        %v1102 = vpop.f32.mrf.mxu0
        %v1103 = vadd.f32 0.0, %v1102
        %v1104 = vpop.f32.mrf.mxu0
        %1105 = vmatprep.mubr.f32.mxu0 0.0
        %1106 = vmatmul.mubr.f32.gmra.mxu0 %v771
        %v1107 = vpop.f32.mrf.mxu0
        %v1108 = vadd.f32 0.0, %v1107
        %v1109 = vpop.f32.mrf.mxu0
        %1110 = vmatprep.mubr.f32.mxu0 0.0
        %1111 = vmatmul.mubr.f32.gmra.mxu0 %v774
        %v1112 = vpop.f32.mrf.mxu0
        %v1113 = vadd.f32 0.0, %v1112
        %v1114 = vpop.f32.mrf.mxu0
        %1115 = vdwg.mxu0
        %v1116 = vmul.f32 %v649, %v649
        %v1117 = vmul.f32 %v654, %v654
        %v1118 = vmul.f32 %v659, %v659
        %v1119 = vmul.f32 %v664, %v664
        %v1120 = vmul.f32 %v746, %v746
        %v1121 = vmul.f32 %v751, %v751
        %v1122 = vmul.f32 %v756, %v756
        %v1123 = vmul.f32 %v761, %v761
        %v1124 = vadd.f32 %v1116, %v1120
        %v1125 = vadd.f32 %v1117, %v1121
        %v1126 = vadd.f32 %v1118, %v1122
        %v1127 = vadd.f32 %v1119, %v1123
        %v1128 = vmul.f32 %v843, %v843
        %v1129 = vmul.f32 %v848, %v848
        %v1130 = vmul.f32 %v853, %v853
        %v1131 = vmul.f32 %v858, %v858
        %v1132 = vadd.f32 %v1124, %v1128
        %v1133 = vadd.f32 %v1125, %v1129
        %v1134 = vadd.f32 %v1126, %v1130
        %v1135 = vadd.f32 %v1127, %v1131
        %v1136 = vadd.f32 %v1132, 1e-08
        %v1137 = vadd.f32 %v1133, 1e-08
        %v1138 = vadd.f32 %v1134, 1e-08
        %v1139 = vadd.f32 %v1135, 1e-08
        %v1140 = vrsqrt.pop %v1136
        %v1141 = vmul.f32 %v1136, %v1140
        %vm1142 = vcmp.eq.f32.partialorder %v1136, inf
        %v1143 = vsel %vm1142, %v1136, %v1141
        %vm1144 = vcmp.eq.f32.partialorder %v1136, 0.0
        %v1145 = vand.u32 %v1136, 2147483648
        %v1146 = vsel %vm1144, %v1145, %v1143
        %v1147 = vrsqrt.pop %v1137
        %v1148 = vmul.f32 %v1137, %v1147
        %vm1149 = vcmp.eq.f32.partialorder %v1137, inf
        %v1150 = vsel %vm1149, %v1137, %v1148
        %vm1151 = vcmp.eq.f32.partialorder %v1137, 0.0
        %v1152 = vand.u32 %v1137, 2147483648
        %v1153 = vsel %vm1151, %v1152, %v1150
        %v1154 = vrsqrt.pop %v1138
        %v1155 = vmul.f32 %v1138, %v1154
        %vm1156 = vcmp.eq.f32.partialorder %v1138, inf
        %v1157 = vsel %vm1156, %v1138, %v1155
        %vm1158 = vcmp.eq.f32.partialorder %v1138, 0.0
        %v1159 = vand.u32 %v1138, 2147483648
        %v1160 = vsel %vm1158, %v1159, %v1157
        %v1161 = vrsqrt.pop %v1139
        %v1162 = vmul.f32 %v1139, %v1161
        %vm1163 = vcmp.eq.f32.partialorder %v1139, inf
        %v1164 = vsel %vm1163, %v1139, %v1162
        %vm1165 = vcmp.eq.f32.partialorder %v1139, 0.0
        %v1166 = vand.u32 %v1139, 2147483648
        %v1167 = vsel %vm1165, %v1166, %v1164
        %v1168 = vld [vmem:[%s4] sm:$0xff]
        %v1169 = vld [vmem:[%s4 + $0x8] sm:$0xff]
        %v1170 = vld [vmem:[%s4 + $0x10] sm:$0xff]
        %v1171 = vld [vmem:[%s4 + $0x18] sm:$0xff]
        %v1172 = vld [vmem:[%s5] sm:$0xff]
        %v1173 = vld [vmem:[%s5 + $0x8] sm:$0xff]
        %v1174 = vld [vmem:[%s5 + $0x10] sm:$0xff]
        %v1175 = vld [vmem:[%s5 + $0x18] sm:$0xff]
        %v1177 = vsel %vm569, %v1146, 0
        %v1180 = vsel %vm569, %v1153, 0
        %v1183 = vsel %vm569, %v1160, 0
        %v1186 = vsel %vm569, %v1167, 0
        %1188 = vmatprep.subr.mxu0 0.0
        %1189 = vmatpush1.msra.mxu0 0.0
        %1190 = vmatprep.subr.mxu0 0.0
        %1191 = vmatpush1.msra.mxu0 0.0
        %1192 = vmatprep.subr.mxu0 0.0
        %1193 = vmatpush1.msra.mxu0 0.0
        %1194 = vmatprep.subr.mxu0 0.0
        %1195 = vmatpush1.msra.mxu0 0.0
        %1196 = vmatprep.subr.mxu0 0.0
        %1197 = vmatpush1.msra.mxu0 0.0
        %1198 = vmatprep.subr.mxu0 0.0
        %1199 = vmatpush1.msra.mxu0 0.0
        %1200 = vmatprep.subr.mxu0 0.0
        %1201 = vmatpush1.msra.mxu0 0.0
        %1202 = vmatprep.subr.mxu0 0.0
        %1203 = vmatpush1.msra.mxu0 0.0
        %1204 = vmatprep.subr.mxu0 0.0
        %1205 = vmatpush1.msra.mxu0 0.0
        %1206 = vmatprep.subr.mxu0 0.0
        %1207 = vmatpush1.msra.mxu0 0.0
        %1208 = vmatprep.subr.mxu0 0.0
        %1209 = vmatpush1.msra.mxu0 0.0
        %1210 = vmatprep.subr.mxu0 0.0
        %1211 = vmatpush1.msra.mxu0 0.0
        %1212 = vmatprep.subr.mxu0 0.0
        %1213 = vmatpush1.msra.mxu0 %v1175
        %1214 = vmatprep.subr.mxu0 0.0
        %1215 = vmatpush1.msra.mxu0 %v1174
        %1216 = vmatprep.subr.mxu0 0.0
        %1217 = vmatpush1.msra.mxu0 %v1173
        %1218 = vmatprep.subr.mxu0 0.0
        %1219 = vmatpush1.msra.mxu0 %v1172
        %1220 = vmatprep.subr.mxu0 0.0
        %1221 = vmatpush2.msra.mxu0 0.0
        %1222 = vmatprep.subr.mxu0 0.0
        %1223 = vmatpush2.msra.mxu0 0.0
        %1224 = vmatprep.subr.mxu0 0.0
        %1225 = vmatpush2.msra.mxu0 0.0
        %1226 = vmatprep.subr.mxu0 0.0
        %1227 = vmatpush2.msra.mxu0 0.0
        %1228 = vmatprep.subr.mxu0 0.0
        %1229 = vmatpush2.msra.mxu0 0.0
        %1230 = vmatprep.subr.mxu0 0.0
        %1231 = vmatpush2.msra.mxu0 0.0
        %1232 = vmatprep.subr.mxu0 0.0
        %1233 = vmatpush2.msra.mxu0 0.0
        %1234 = vmatprep.subr.mxu0 0.0
        %1235 = vmatpush2.msra.mxu0 0.0
        %1236 = vmatprep.subr.mxu0 0.0
        %1237 = vmatpush2.msra.mxu0 0.0
        %1238 = vmatprep.subr.mxu0 0.0
        %1239 = vmatpush2.msra.mxu0 0.0
        %1240 = vmatprep.subr.mxu0 0.0
        %1241 = vmatpush2.msra.mxu0 0.0
        %1242 = vmatprep.subr.mxu0 0.0
        %1243 = vmatpush2.msra.mxu0 0.0
        %1244 = vmatprep.subr.mxu0 0.0
        %1245 = vmatpush2.msra.mxu0 0.0
        %1246 = vmatprep.subr.mxu0 0.0
        %1247 = vmatpush2.msra.mxu0 0.0
        %1248 = vmatprep.subr.mxu0 0.0
        %1249 = vmatpush2.msra.mxu0 0.0
        %1250 = vmatprep.subr.mxu0 0.0
        %1251 = vmatpush2.msra.mxu0 0.0
        %1252 = vmatprep.mubr.f32.mxu0 0.0
        %1253 = vmatmul.mubr.f32.gmra.mxu0 %v1177
        %v1254 = vpop.f32.mrf.mxu0
        %v1255 = vadd.f32 0.0, %v1254
        %v1256 = vpop.f32.mrf.mxu0
        %1257 = vmatprep.mubr.f32.mxu0 0.0
        %1258 = vmatmul.mubr.f32.gmra.mxu0 %v1180
        %v1259 = vpop.f32.mrf.mxu0
        %v1260 = vadd.f32 0.0, %v1259
        %v1261 = vpop.f32.mrf.mxu0
        %1262 = vmatprep.mubr.f32.mxu0 0.0
        %1263 = vmatmul.mubr.f32.gmra.mxu0 %v1183
        %v1264 = vpop.f32.mrf.mxu0
        %v1265 = vadd.f32 0.0, %v1264
        %v1266 = vpop.f32.mrf.mxu0
        %1267 = vmatprep.mubr.f32.mxu0 0.0
        %1268 = vmatmul.mubr.f32.gmra.mxu0 %v1186
        %v1269 = vpop.f32.mrf.mxu0
        %v1270 = vadd.f32 0.0, %v1269
        %v1271 = vpop.f32.mrf.mxu0
        %1272 = vdwg.mxu0
        %v1274 = vsel %vm569, %v543, 0
        %v1277 = vsel %vm569, %v544, 0
        %v1280 = vsel %vm569, %v545, 0
        %v1283 = vsel %vm569, %v546, 0
        %1285 = vmatprep.subr.mxu0 0.0
        %1286 = vmatpush1.msra.mxu0 0.0
        %1287 = vmatprep.subr.mxu0 0.0
        %1288 = vmatpush1.msra.mxu0 0.0
        %1289 = vmatprep.subr.mxu0 0.0
        %1290 = vmatpush1.msra.mxu0 0.0
        %1291 = vmatprep.subr.mxu0 0.0
        %1292 = vmatpush1.msra.mxu0 0.0
        %1293 = vmatprep.subr.mxu0 0.0
        %1294 = vmatpush1.msra.mxu0 0.0
        %1295 = vmatprep.subr.mxu0 0.0
        %1296 = vmatpush1.msra.mxu0 0.0
        %1297 = vmatprep.subr.mxu0 0.0
        %1298 = vmatpush1.msra.mxu0 0.0
        %1299 = vmatprep.subr.mxu0 0.0
        %1300 = vmatpush1.msra.mxu0 0.0
        %1301 = vmatprep.subr.mxu0 0.0
        %1302 = vmatpush1.msra.mxu0 0.0
        %1303 = vmatprep.subr.mxu0 0.0
        %1304 = vmatpush1.msra.mxu0 0.0
        %1305 = vmatprep.subr.mxu0 0.0
        %1306 = vmatpush1.msra.mxu0 0.0
        %1307 = vmatprep.subr.mxu0 0.0
        %1308 = vmatpush1.msra.mxu0 0.0
        %1309 = vmatprep.subr.mxu0 0.0
        %1310 = vmatpush1.msra.mxu0 %v1171
        %1311 = vmatprep.subr.mxu0 0.0
        %1312 = vmatpush1.msra.mxu0 %v1170
        %1313 = vmatprep.subr.mxu0 0.0
        %1314 = vmatpush1.msra.mxu0 %v1169
        %1315 = vmatprep.subr.mxu0 0.0
        %1316 = vmatpush1.msra.mxu0 %v1168
        %1317 = vmatprep.subr.mxu0 0.0
        %1318 = vmatpush2.msra.mxu0 0.0
        %1319 = vmatprep.subr.mxu0 0.0
        %1320 = vmatpush2.msra.mxu0 0.0
        %1321 = vmatprep.subr.mxu0 0.0
        %1322 = vmatpush2.msra.mxu0 0.0
        %1323 = vmatprep.subr.mxu0 0.0
        %1324 = vmatpush2.msra.mxu0 0.0
        %1325 = vmatprep.subr.mxu0 0.0
        %1326 = vmatpush2.msra.mxu0 0.0
        %1327 = vmatprep.subr.mxu0 0.0
        %1328 = vmatpush2.msra.mxu0 0.0
        %1329 = vmatprep.subr.mxu0 0.0
        %1330 = vmatpush2.msra.mxu0 0.0
        %1331 = vmatprep.subr.mxu0 0.0
        %1332 = vmatpush2.msra.mxu0 0.0
        %1333 = vmatprep.subr.mxu0 0.0
        %1334 = vmatpush2.msra.mxu0 0.0
        %1335 = vmatprep.subr.mxu0 0.0
        %1336 = vmatpush2.msra.mxu0 0.0
        %1337 = vmatprep.subr.mxu0 0.0
        %1338 = vmatpush2.msra.mxu0 0.0
        %1339 = vmatprep.subr.mxu0 0.0
        %1340 = vmatpush2.msra.mxu0 0.0
        %1341 = vmatprep.subr.mxu0 0.0
        %1342 = vmatpush2.msra.mxu0 0.0
        %1343 = vmatprep.subr.mxu0 0.0
        %1344 = vmatpush2.msra.mxu0 0.0
        %1345 = vmatprep.subr.mxu0 0.0
        %1346 = vmatpush2.msra.mxu0 0.0
        %1347 = vmatprep.subr.mxu0 0.0
        %1348 = vmatpush2.msra.mxu0 0.0
        %1349 = vmatprep.mubr.f32.mxu0 0.0
        %1350 = vmatmul.mubr.f32.gmra.mxu0 %v1274
        %v1351 = vpop.f32.mrf.mxu0
        %v1352 = vadd.f32 %v1255, %v1351
        %v1353 = vpop.f32.mrf.mxu0
        %1354 = vmatprep.mubr.f32.mxu0 0.0
        %1355 = vmatmul.mubr.f32.gmra.mxu0 %v1277
        %v1356 = vpop.f32.mrf.mxu0
        %v1357 = vadd.f32 %v1260, %v1356
        %v1358 = vpop.f32.mrf.mxu0
        %1359 = vmatprep.mubr.f32.mxu0 0.0
        %1360 = vmatmul.mubr.f32.gmra.mxu0 %v1280
        %v1361 = vpop.f32.mrf.mxu0
        %v1362 = vadd.f32 %v1265, %v1361
        %v1363 = vpop.f32.mrf.mxu0
        %1364 = vmatprep.mubr.f32.mxu0 0.0
        %1365 = vmatmul.mubr.f32.gmra.mxu0 %v1283
        %v1366 = vpop.f32.mrf.mxu0
        %v1367 = vadd.f32 %v1270, %v1366
        %v1368 = vpop.f32.mrf.mxu0
        %1369 = vdwg.mxu0
        %v1370 = vld [vmem:[%s6] sm:$0x1]
        %v1372 = vlaneseq
        %v1373 = vshrl.u32 %v1372, 7
        %v1374 = vsub.s32 0, %v1373
        %v1375 = vrot.slane %v1370, %v1374
        %v1377 = vadd.f32 %v1352, %v1375
        %v1378 = vadd.f32 %v1357, %v1375
        %v1379 = vadd.f32 %v1362, %v1375
        %v1380 = vadd.f32 %v1367, %v1375
        %v1381 = vxor.u32 %v1377, 2147483648
        %v1382 = vxor.u32 %v1378, 2147483648
        %v1383 = vxor.u32 %v1379, 2147483648
        %v1384 = vxor.u32 %v1380, 2147483648
        %v1385 = vmul.f32 %v1381, 1.442695
        %v1386 = vpow.pop %v1385
        %v1387 = vmul.f32 %v1382, 1.442695
        %v1388 = vpow.pop %v1387
        %v1389 = vmul.f32 %v1383, 1.442695
        %v1390 = vpow.pop %v1389
        %v1391 = vmul.f32 %v1384, 1.442695
        %v1392 = vpow.pop %v1391
        %v1393 = vadd.f32 %v1386, 1.0
        %v1394 = vadd.f32 %v1388, 1.0
        %v1395 = vadd.f32 %v1390, 1.0
        %v1396 = vadd.f32 %v1392, 1.0
        %v1397 = vrcp.pop %v1393
        %v1398 = vmul.f32 1.0, %v1397
        %v1399 = vrcp.pop %v1394
        %v1400 = vmul.f32 1.0, %v1399
        %v1401 = vrcp.pop %v1395
        %v1402 = vmul.f32 1.0, %v1401
        %v1403 = vrcp.pop %v1396
        %v1404 = vmul.f32 1.0, %v1403
        %v1405 = vmul.f32 %v1377, %v1398
        %v1406 = vmul.f32 %v1378, %v1400
        %v1407 = vmul.f32 %v1379, %v1402
        %v1408 = vmul.f32 %v1380, %v1404
        %v1409 = vld [vmem:[%s7] sm:$0xff]
        %v1410 = vld [vmem:[%s7 + $0x8] sm:$0xff]
        %v1411 = vld [vmem:[%s7 + $0x10] sm:$0xff]
        %v1412 = vld [vmem:[%s7 + $0x18] sm:$0xff]
        %v1413 = vld [vmem:[%s10] sm:$0x1]
        %v1415 = vlaneseq
        %v1416 = vshrl.u32 %v1415, 7
        %v1417 = vsub.s32 0, %v1416
        %v1418 = vrot.slane %v1413, %v1417
        %v1421 = vsel %vm569, %v1405, 0
        %v1424 = vsel %vm569, %v1406, 0
        %v1427 = vsel %vm569, %v1407, 0
        %v1430 = vsel %vm569, %v1408, 0
        %1432 = vmatprep.subr.mxu0 0.0
        %1433 = vmatpush1.msra.mxu0 0.0
        %1434 = vmatprep.subr.mxu0 0.0
        %1435 = vmatpush1.msra.mxu0 0.0
        %1436 = vmatprep.subr.mxu0 0.0
        %1437 = vmatpush1.msra.mxu0 0.0
        %1438 = vmatprep.subr.mxu0 0.0
        %1439 = vmatpush1.msra.mxu0 0.0
        %1440 = vmatprep.subr.mxu0 0.0
        %1441 = vmatpush1.msra.mxu0 0.0
        %1442 = vmatprep.subr.mxu0 0.0
        %1443 = vmatpush1.msra.mxu0 0.0
        %1444 = vmatprep.subr.mxu0 0.0
        %1445 = vmatpush1.msra.mxu0 0.0
        %1446 = vmatprep.subr.mxu0 0.0
        %1447 = vmatpush1.msra.mxu0 0.0
        %1448 = vmatprep.subr.mxu0 0.0
        %1449 = vmatpush1.msra.mxu0 0.0
        %1450 = vmatprep.subr.mxu0 0.0
        %1451 = vmatpush1.msra.mxu0 0.0
        %1452 = vmatprep.subr.mxu0 0.0
        %1453 = vmatpush1.msra.mxu0 0.0
        %1454 = vmatprep.subr.mxu0 0.0
        %1455 = vmatpush1.msra.mxu0 0.0
        %1456 = vmatprep.subr.mxu0 0.0
        %1457 = vmatpush1.msra.mxu0 %v1412
        %1458 = vmatprep.subr.mxu0 0.0
        %1459 = vmatpush1.msra.mxu0 %v1411
        %1460 = vmatprep.subr.mxu0 0.0
        %1461 = vmatpush1.msra.mxu0 %v1410
        %1462 = vmatprep.subr.mxu0 0.0
        %1463 = vmatpush1.msra.mxu0 %v1409
        %1464 = vmatprep.subr.mxu0 0.0
        %1465 = vmatpush2.msra.mxu0 0.0
        %1466 = vmatprep.subr.mxu0 0.0
        %1467 = vmatpush2.msra.mxu0 0.0
        %1468 = vmatprep.subr.mxu0 0.0
        %1469 = vmatpush2.msra.mxu0 0.0
        %1470 = vmatprep.subr.mxu0 0.0
        %1471 = vmatpush2.msra.mxu0 0.0
        %1472 = vmatprep.subr.mxu0 0.0
        %1473 = vmatpush2.msra.mxu0 0.0
        %1474 = vmatprep.subr.mxu0 0.0
        %1475 = vmatpush2.msra.mxu0 0.0
        %1476 = vmatprep.subr.mxu0 0.0
        %1477 = vmatpush2.msra.mxu0 0.0
        %1478 = vmatprep.subr.mxu0 0.0
        %1479 = vmatpush2.msra.mxu0 0.0
        %1480 = vmatprep.subr.mxu0 0.0
        %1481 = vmatpush2.msra.mxu0 0.0
        %1482 = vmatprep.subr.mxu0 0.0
        %1483 = vmatpush2.msra.mxu0 0.0
        %1484 = vmatprep.subr.mxu0 0.0
        %1485 = vmatpush2.msra.mxu0 0.0
        %1486 = vmatprep.subr.mxu0 0.0
        %1487 = vmatpush2.msra.mxu0 0.0
        %1488 = vmatprep.subr.mxu0 0.0
        %1489 = vmatpush2.msra.mxu0 0.0
        %1490 = vmatprep.subr.mxu0 0.0
        %1491 = vmatpush2.msra.mxu0 0.0
        %1492 = vmatprep.subr.mxu0 0.0
        %1493 = vmatpush2.msra.mxu0 0.0
        %1494 = vmatprep.subr.mxu0 0.0
        %1495 = vmatpush2.msra.mxu0 0.0
        %1496 = vmatprep.mubr.f32.mxu0 0.0
        %1497 = vmatmul.mubr.f32.gmra.mxu0 %v1421
        %v1498 = vpop.f32.mrf.mxu0
        %v1499 = vadd.f32 %v1418, %v1498
        %v1500 = vpop.f32.mrf.mxu0
        %1501 = vmatprep.mubr.f32.mxu0 0.0
        %1502 = vmatmul.mubr.f32.gmra.mxu0 %v1424
        %v1503 = vpop.f32.mrf.mxu0
        %v1504 = vadd.f32 %v1418, %v1503
        %v1505 = vpop.f32.mrf.mxu0
        %1506 = vmatprep.mubr.f32.mxu0 0.0
        %1507 = vmatmul.mubr.f32.gmra.mxu0 %v1427
        %v1508 = vpop.f32.mrf.mxu0
        %v1509 = vadd.f32 %v1418, %v1508
        %v1510 = vpop.f32.mrf.mxu0
        %1511 = vmatprep.mubr.f32.mxu0 0.0
        %1512 = vmatmul.mubr.f32.gmra.mxu0 %v1430
        %v1513 = vpop.f32.mrf.mxu0
        %v1514 = vadd.f32 %v1418, %v1513
        %v1515 = vpop.f32.mrf.mxu0
        %1516 = vdwg.mxu0
        %v1517 = vld [vmem:[%s8] sm:$0xff]
        %v1518 = vld [vmem:[%s8 + $0x8] sm:$0xff]
        %v1519 = vld [vmem:[%s8 + $0x10] sm:$0xff]
        %v1520 = vld [vmem:[%s8 + $0x18] sm:$0xff]
        %v1521 = vld [vmem:[%s11] sm:$0x1]
        %v1523 = vlaneseq
        %v1524 = vshrl.u32 %v1523, 7
        %v1525 = vsub.s32 0, %v1524
        %v1526 = vrot.slane %v1521, %v1525
        %1528 = vmatprep.subr.mxu0 0.0
        %1529 = vmatpush1.msra.mxu0 0.0
        %1530 = vmatprep.subr.mxu0 0.0
        %1531 = vmatpush1.msra.mxu0 0.0
        %1532 = vmatprep.subr.mxu0 0.0
        %1533 = vmatpush1.msra.mxu0 0.0
        %1534 = vmatprep.subr.mxu0 0.0
        %1535 = vmatpush1.msra.mxu0 0.0
        %1536 = vmatprep.subr.mxu0 0.0
        %1537 = vmatpush1.msra.mxu0 0.0
        %1538 = vmatprep.subr.mxu0 0.0
        %1539 = vmatpush1.msra.mxu0 0.0
        %1540 = vmatprep.subr.mxu0 0.0
        %1541 = vmatpush1.msra.mxu0 0.0
        %1542 = vmatprep.subr.mxu0 0.0
        %1543 = vmatpush1.msra.mxu0 0.0
        %1544 = vmatprep.subr.mxu0 0.0
        %1545 = vmatpush1.msra.mxu0 0.0
        %1546 = vmatprep.subr.mxu0 0.0
        %1547 = vmatpush1.msra.mxu0 0.0
        %1548 = vmatprep.subr.mxu0 0.0
        %1549 = vmatpush1.msra.mxu0 0.0
        %1550 = vmatprep.subr.mxu0 0.0
        %1551 = vmatpush1.msra.mxu0 0.0
        %1552 = vmatprep.subr.mxu0 0.0
        %1553 = vmatpush1.msra.mxu0 %v1520
        %1554 = vmatprep.subr.mxu0 0.0
        %1555 = vmatpush1.msra.mxu0 %v1519
        %1556 = vmatprep.subr.mxu0 0.0
        %1557 = vmatpush1.msra.mxu0 %v1518
        %1558 = vmatprep.subr.mxu0 0.0
        %1559 = vmatpush1.msra.mxu0 %v1517
        %1560 = vmatprep.subr.mxu0 0.0
        %1561 = vmatpush2.msra.mxu0 0.0
        %1562 = vmatprep.subr.mxu0 0.0
        %1563 = vmatpush2.msra.mxu0 0.0
        %1564 = vmatprep.subr.mxu0 0.0
        %1565 = vmatpush2.msra.mxu0 0.0
        %1566 = vmatprep.subr.mxu0 0.0
        %1567 = vmatpush2.msra.mxu0 0.0
        %1568 = vmatprep.subr.mxu0 0.0
        %1569 = vmatpush2.msra.mxu0 0.0
        %1570 = vmatprep.subr.mxu0 0.0
        %1571 = vmatpush2.msra.mxu0 0.0
        %1572 = vmatprep.subr.mxu0 0.0
        %1573 = vmatpush2.msra.mxu0 0.0
        %1574 = vmatprep.subr.mxu0 0.0
        %1575 = vmatpush2.msra.mxu0 0.0
        %1576 = vmatprep.subr.mxu0 0.0
        %1577 = vmatpush2.msra.mxu0 0.0
        %1578 = vmatprep.subr.mxu0 0.0
        %1579 = vmatpush2.msra.mxu0 0.0
        %1580 = vmatprep.subr.mxu0 0.0
        %1581 = vmatpush2.msra.mxu0 0.0
        %1582 = vmatprep.subr.mxu0 0.0
        %1583 = vmatpush2.msra.mxu0 0.0
        %1584 = vmatprep.subr.mxu0 0.0
        %1585 = vmatpush2.msra.mxu0 0.0
        %1586 = vmatprep.subr.mxu0 0.0
        %1587 = vmatpush2.msra.mxu0 0.0
        %1588 = vmatprep.subr.mxu0 0.0
        %1589 = vmatpush2.msra.mxu0 0.0
        %1590 = vmatprep.subr.mxu0 0.0
        %1591 = vmatpush2.msra.mxu0 0.0
        %1592 = vmatprep.mubr.f32.mxu0 0.0
        %1593 = vmatmul.mubr.f32.gmra.mxu0 %v1421
        %v1594 = vpop.f32.mrf.mxu0
        %v1595 = vadd.f32 %v1526, %v1594
        %v1596 = vpop.f32.mrf.mxu0
        %1597 = vmatprep.mubr.f32.mxu0 0.0
        %1598 = vmatmul.mubr.f32.gmra.mxu0 %v1424
        %v1599 = vpop.f32.mrf.mxu0
        %v1600 = vadd.f32 %v1526, %v1599
        %v1601 = vpop.f32.mrf.mxu0
        %1602 = vmatprep.mubr.f32.mxu0 0.0
        %1603 = vmatmul.mubr.f32.gmra.mxu0 %v1427
        %v1604 = vpop.f32.mrf.mxu0
        %v1605 = vadd.f32 %v1526, %v1604
        %v1606 = vpop.f32.mrf.mxu0
        %1607 = vmatprep.mubr.f32.mxu0 0.0
        %1608 = vmatmul.mubr.f32.gmra.mxu0 %v1430
        %v1609 = vpop.f32.mrf.mxu0
        %v1610 = vadd.f32 %v1526, %v1609
        %v1611 = vpop.f32.mrf.mxu0
        %1612 = vdwg.mxu0
        %v1613 = vld [vmem:[%s9] sm:$0xff]
        %v1614 = vld [vmem:[%s9 + $0x8] sm:$0xff]
        %v1615 = vld [vmem:[%s9 + $0x10] sm:$0xff]
        %v1616 = vld [vmem:[%s9 + $0x18] sm:$0xff]
        %v1617 = vld [vmem:[%s12] sm:$0x1]
        %v1619 = vlaneseq
        %v1620 = vshrl.u32 %v1619, 7
        %v1621 = vsub.s32 0, %v1620
        %v1622 = vrot.slane %v1617, %v1621
        %1624 = vmatprep.subr.mxu0 0.0
        %1625 = vmatpush1.msra.mxu0 0.0
        %1626 = vmatprep.subr.mxu0 0.0
        %1627 = vmatpush1.msra.mxu0 0.0
        %1628 = vmatprep.subr.mxu0 0.0
        %1629 = vmatpush1.msra.mxu0 0.0
        %1630 = vmatprep.subr.mxu0 0.0
        %1631 = vmatpush1.msra.mxu0 0.0
        %1632 = vmatprep.subr.mxu0 0.0
        %1633 = vmatpush1.msra.mxu0 0.0
        %1634 = vmatprep.subr.mxu0 0.0
        %1635 = vmatpush1.msra.mxu0 0.0
        %1636 = vmatprep.subr.mxu0 0.0
        %1637 = vmatpush1.msra.mxu0 0.0
        %1638 = vmatprep.subr.mxu0 0.0
        %1639 = vmatpush1.msra.mxu0 0.0
        %1640 = vmatprep.subr.mxu0 0.0
        %1641 = vmatpush1.msra.mxu0 0.0
        %1642 = vmatprep.subr.mxu0 0.0
        %1643 = vmatpush1.msra.mxu0 0.0
        %1644 = vmatprep.subr.mxu0 0.0
        %1645 = vmatpush1.msra.mxu0 0.0
        %1646 = vmatprep.subr.mxu0 0.0
        %1647 = vmatpush1.msra.mxu0 0.0
        %1648 = vmatprep.subr.mxu0 0.0
        %1649 = vmatpush1.msra.mxu0 %v1616
        %1650 = vmatprep.subr.mxu0 0.0
        %1651 = vmatpush1.msra.mxu0 %v1615
        %1652 = vmatprep.subr.mxu0 0.0
        %1653 = vmatpush1.msra.mxu0 %v1614
        %1654 = vmatprep.subr.mxu0 0.0
        %1655 = vmatpush1.msra.mxu0 %v1613
        %1656 = vmatprep.subr.mxu0 0.0
        %1657 = vmatpush2.msra.mxu0 0.0
        %1658 = vmatprep.subr.mxu0 0.0
        %1659 = vmatpush2.msra.mxu0 0.0
        %1660 = vmatprep.subr.mxu0 0.0
        %1661 = vmatpush2.msra.mxu0 0.0
        %1662 = vmatprep.subr.mxu0 0.0
        %1663 = vmatpush2.msra.mxu0 0.0
        %1664 = vmatprep.subr.mxu0 0.0
        %1665 = vmatpush2.msra.mxu0 0.0
        %1666 = vmatprep.subr.mxu0 0.0
        %1667 = vmatpush2.msra.mxu0 0.0
        %1668 = vmatprep.subr.mxu0 0.0
        %1669 = vmatpush2.msra.mxu0 0.0
        %1670 = vmatprep.subr.mxu0 0.0
        %1671 = vmatpush2.msra.mxu0 0.0
        %1672 = vmatprep.subr.mxu0 0.0
        %1673 = vmatpush2.msra.mxu0 0.0
        %1674 = vmatprep.subr.mxu0 0.0
        %1675 = vmatpush2.msra.mxu0 0.0
        %1676 = vmatprep.subr.mxu0 0.0
        %1677 = vmatpush2.msra.mxu0 0.0
        %1678 = vmatprep.subr.mxu0 0.0
        %1679 = vmatpush2.msra.mxu0 0.0
        %1680 = vmatprep.subr.mxu0 0.0
        %1681 = vmatpush2.msra.mxu0 0.0
        %1682 = vmatprep.subr.mxu0 0.0
        %1683 = vmatpush2.msra.mxu0 0.0
        %1684 = vmatprep.subr.mxu0 0.0
        %1685 = vmatpush2.msra.mxu0 0.0
        %1686 = vmatprep.subr.mxu0 0.0
        %1687 = vmatpush2.msra.mxu0 0.0
        %1688 = vmatprep.mubr.f32.mxu0 0.0
        %1689 = vmatmul.mubr.f32.gmra.mxu0 %v1421
        %v1690 = vpop.f32.mrf.mxu0
        %v1691 = vadd.f32 %v1622, %v1690
        %v1692 = vpop.f32.mrf.mxu0
        %1693 = vmatprep.mubr.f32.mxu0 0.0
        %1694 = vmatmul.mubr.f32.gmra.mxu0 %v1424
        %v1695 = vpop.f32.mrf.mxu0
        %v1696 = vadd.f32 %v1622, %v1695
        %v1697 = vpop.f32.mrf.mxu0
        %1698 = vmatprep.mubr.f32.mxu0 0.0
        %1699 = vmatmul.mubr.f32.gmra.mxu0 %v1427
        %v1700 = vpop.f32.mrf.mxu0
        %v1701 = vadd.f32 %v1622, %v1700
        %v1702 = vpop.f32.mrf.mxu0
        %1703 = vmatprep.mubr.f32.mxu0 0.0
        %1704 = vmatmul.mubr.f32.gmra.mxu0 %v1430
        %v1705 = vpop.f32.mrf.mxu0
        %v1706 = vadd.f32 %v1622, %v1705
        %v1707 = vpop.f32.mrf.mxu0
        %1708 = vdwg.mxu0
        %v1709 = vmul.f32 %v649, %v928
        %v1710 = vmul.f32 %v654, %v933
        %v1711 = vmul.f32 %v659, %v938
        %v1712 = vmul.f32 %v664, %v943
        %v1713 = vmul.f32 %v746, %v1013
        %v1714 = vmul.f32 %v751, %v1018
        %v1715 = vmul.f32 %v756, %v1023
        %v1716 = vmul.f32 %v761, %v1028
        %v1717 = vadd.f32 %v1709, %v1713
        %v1718 = vadd.f32 %v1710, %v1714
        %v1719 = vadd.f32 %v1711, %v1715
        %v1720 = vadd.f32 %v1712, %v1716
        %v1721 = vmul.f32 %v843, %v1098
        %v1722 = vmul.f32 %v848, %v1103
        %v1723 = vmul.f32 %v853, %v1108
        %v1724 = vmul.f32 %v858, %v1113
        %v1725 = vadd.f32 %v1717, %v1721
        %v1726 = vadd.f32 %v1718, %v1722
        %v1727 = vadd.f32 %v1719, %v1723
        %v1728 = vadd.f32 %v1720, %v1724
        %v1729 = vadd.f32 %v543, %v1499
        %v1730 = vadd.f32 %v544, %v1504
        %v1731 = vadd.f32 %v545, %v1509
        %v1732 = vadd.f32 %v546, %v1514
        %v1733 = vmul.f32 %v1691, %v1725
        %v1734 = vmul.f32 %v1696, %v1726
        %v1735 = vmul.f32 %v1701, %v1727
        %v1736 = vmul.f32 %v1706, %v1728
        %v1737 = vadd.f32 %v1729, %v1733
        %v1738 = vadd.f32 %v1730, %v1734
        %v1739 = vadd.f32 %v1731, %v1735
        %v1740 = vadd.f32 %v1732, %v1736
        %v1741 = vmul.f32 %v1595, %v928
        %v1742 = vmul.f32 %v1600, %v933
        %v1743 = vmul.f32 %v1605, %v938
        %v1744 = vmul.f32 %v1610, %v943
        %v1745 = vadd.f32 %v547, %v1741
        %v1746 = vadd.f32 %v548, %v1742
        %v1747 = vadd.f32 %v549, %v1743
        %v1748 = vadd.f32 %v550, %v1744
        %v1749 = vmul.f32 %v1595, %v1013
        %v1750 = vmul.f32 %v1600, %v1018
        %v1751 = vmul.f32 %v1605, %v1023
        %v1752 = vmul.f32 %v1610, %v1028
        %v1753 = vadd.f32 %v552, %v1749
        %v1754 = vadd.f32 %v553, %v1750
        %v1755 = vadd.f32 %v554, %v1751
        %v1756 = vadd.f32 %v555, %v1752
        %v1757 = vmul.f32 %v1595, %v1098
        %v1758 = vmul.f32 %v1600, %v1103
        %v1759 = vmul.f32 %v1605, %v1108
        %v1760 = vmul.f32 %v1610, %v1113
        %v1761 = vadd.f32 %v557, %v1757
        %v1762 = vadd.f32 %v558, %v1758
        %v1763 = vadd.f32 %v559, %v1759
        %v1764 = vadd.f32 %v560, %v1760
        %1769 = vrot.lane.b32.xlu0 %v1745, 32
        %v1770 = vpop.permute.xlu0 %1769
        %1771 = vrot.lane.b32.xlu0 %v1746, 32
        %v1772 = vpop.permute.xlu0 %1771
        %1773 = vrot.lane.b32.xlu0 %v1747, 32
        %v1774 = vpop.permute.xlu0 %1773
        %1775 = vrot.lane.b32.xlu0 %v1748, 32
        %v1776 = vpop.permute.xlu0 %1775
        %1785 = vrot.lane.b32.xlu0 %v1753, 64
        %v1786 = vpop.permute.xlu0 %1785
        %1787 = vrot.lane.b32.xlu0 %v1754, 64
        %v1788 = vpop.permute.xlu0 %1787
        %1789 = vrot.lane.b32.xlu0 %v1755, 64
        %v1790 = vpop.permute.xlu0 %1789
        %1791 = vrot.lane.b32.xlu0 %v1756, 64
        %v1792 = vpop.permute.xlu0 %1791
        %1801 = vrot.lane.b32.xlu0 %v1761, 96
        %v1802 = vpop.permute.xlu0 %1801
        %1803 = vrot.lane.b32.xlu0 %v1762, 96
        %v1804 = vpop.permute.xlu0 %1803
        %1805 = vrot.lane.b32.xlu0 %v1763, 96
        %v1806 = vpop.permute.xlu0 %1805
        %1807 = vrot.lane.b32.xlu0 %v1764, 96
        %v1808 = vpop.permute.xlu0 %1807
        %v1813 = vsel %vm569, %v1737, %v1770
        %v1814 = vsel %vm569, %v1738, %v1772
        %v1815 = vsel %vm569, %v1739, %v1774
        %v1816 = vsel %vm569, %v1740, %v1776
        %vm1817 = vcmask 523264
        %v1818 = vsel %vm1817, %v1813, %v1786
        %v1819 = vsel %vm1817, %v1814, %v1788
        %v1820 = vsel %vm1817, %v1815, %v1790
        %v1821 = vsel %vm1817, %v1816, %v1792
        %vm1822 = vcmask 785408
        %v1823 = vsel %vm1822, %v1818, %v1802
        %v1824 = vsel %vm1822, %v1819, %v1804
        %v1825 = vsel %vm1822, %v1820, %v1806
        %v1826 = vsel %vm1822, %v1821, %v1808
        %1827 = vst [vmem:[%s534] sm:$0xff] %v1823
        %1828 = vst [vmem:[%s534 + $0x8] sm:$0xff] %v1824
        %1829 = vst [vmem:[%s534 + $0x10] sm:$0xff] %v1825
        %1830 = vst [vmem:[%s534 + $0x18] sm:$0xff] %v1826
        %s1831 = sand.u32 %s318, 1
        %s1832 = scalar_lea.sflag [#allocation4], %s1831
        %s1833 = sand.u32 %s318, 1
        %s1834 = smul.addr %s1833, 32
        %s1835 = scalar_lea.vmem [#allocation3], %s1834
        // Predicated region
        $region111: #{tpu_custom_call.1} parent=105 // pred_check
          %p1836 = pneg %p328
        $region112: #{tpu_custom_call.1} parent=105 // pred_check_branch
          %1838 = sbr.rel (%p1836) target = $region114
        $region113: #{tpu_custom_call.1} parent=105 // pred_region
          %s1839 = smul.u32 4, %s27
          %s1841 = ssub.s32 512, 512
          %1842 = vsyncadd %s1832, %s1841
          %s1843 = smul.addr %s1839, 128
          %s1844 = scalar_lea.hbm %s13, %s1843
          %s1845 = sshll.u32 %s1835, 4
          %s1846 = int_to_ptr.vmem [resolvable:$true] %s1845
          %1851 = dma.vmem_to_hbm [thread:$0]  %s1846, 512, %s1844, %s1832, 128, 128, 8
        $region114: #{tpu_custom_call.1} parent=105 // pred_fallthru
          _
      $region106: #{tpu_custom_call.1} parent=5 // pred_fallthru
        _
      %p1852 = scmp.le.s32.totalorder 2, %s22
      // Predicated region
      $region115: #{tpu_custom_call.1} parent=5 // pred_check
        %p1853 = pneg %p1852
      $region116: #{tpu_custom_call.1} parent=5 // pred_check_branch
        %1855 = sbr.rel (%p1853) target = $region118
      $region117: #{tpu_custom_call.1} parent=5 // pred_region
        %s1856 = ssub.s32 %s22, 2
        // Predicated region
        $region119: #{tpu_custom_call.1} parent=117 // pred_check
          %p1857 = pneg %p334
        $region120: #{tpu_custom_call.1} parent=117 // pred_check_branch
          %1859 = sbr.rel (%p1857) target = $region122
        $region121: #{tpu_custom_call.1} parent=117 // pred_region
          %s1860 = sand.u32 %s319, 1
          %s1861 = scalar_lea.sflag [#allocation4], %s1860
          %s1862 = sand.u32 %s319, 1
          %s1863 = smul.addr %s1862, 32
          %s1864 = scalar_lea.vmem [#allocation3], %s1863
          %1865 = dma.done %s1861, 512
        $region122: #{tpu_custom_call.1} parent=117 // pred_fallthru
          _
      $region118: #{tpu_custom_call.1} parent=5 // pred_fallthru
        _
    $region6: #{tpu_custom_call.1} parent=1 // loop_footer
      %s26 = sadd.s32 1, %s22
    $region7: #{tpu_custom_call.1} parent=1 // loop_footer_branch
      %21 = sbr.rel target = $region3
    $region8: #{tpu_custom_call.1} parent=1 // loop_exit
      _
    %1866 = vsyncpa [#allocation4], 1
    %s1867 = scalar_lea.sflag [#allocation4], 1
    %1868 = vsyncpa %s1867, 1

</llo_original>
